<compile_context>
chip_gen: v5e
topology: v5e:2x2
jax: 0.10.0
libtpu: 0.0.40
codegen_flags: <defaults>
</compile_context>

<pallas_src>
import jax
import jax.numpy as jnp
from jax.experimental import pallas as pl
from jax.experimental.pallas import tpu as pltpu


def _round_up(n, m):
    return ((n + m - 1) // m) * m


def _cdiv(a, b):
    return (a + b - 1) // b


def _vmem_capacity_bytes():
    try:
        info = pltpu.get_tpu_info()
        cap = getattr(info, "vmem_capacity_bytes", None)
        if cap:
            return int(cap)
    except Exception:
        pass
    return 64 << 20  # conservative fallback (v7x per-TensorCore VMEM)


def prepare_ffn_params(w1, b1, w2, b2, compute_dtype=jnp.bfloat16):
    """One-time parameter prep: weights in MXU compute dtype, biases in f32."""
    return (w1.astype(compute_dtype), b1.astype(jnp.float32),
            w2.astype(compute_dtype), b2.astype(jnp.float32))


# --------------------------------------------------------------------------
# Kernels
# --------------------------------------------------------------------------

def ffn_resident_kernel(x_ref, w1_ref, b1_ref, w2_ref, b2_ref, o_ref):
    # x_ref:  (tm, d_model)    original dtype, cast to bf16 in-kernel
    # w1_ref: (d_model, d_ff)  resident across all row tiles
    # b1_ref: (1, d_ff)        f32
    # w2_ref: (d_ff, d_model)  resident across all row tiles
    # b2_ref: (1, d_model)     f32
    cdt = w1_ref.dtype
    h = jnp.dot(x_ref[...].astype(cdt), w1_ref[...],
                preferred_element_type=jnp.float32)
    h = jnp.maximum(h + b1_ref[...], 0.0)
    y = jnp.dot(h.astype(cdt), w2_ref[...], preferred_element_type=jnp.float32)
    o_ref[...] = (y + b2_ref[...]).astype(o_ref.dtype)


def ffn_reduce_kernel(x_ref, w1_ref, b1_ref, w2_ref, b2_ref, o_ref, acc_ref):
    # Grid: (rows, d_ff-reduction).  acc_ref: (tm, d_model) f32 scratch.
    j = pl.program_id(1)
    cdt = w1_ref.dtype

    @pl.when(j == 0)
    def _():
        acc_ref[...] = jnp.zeros_like(acc_ref)

    h = jnp.dot(x_ref[...].astype(cdt), w1_ref[...],
                preferred_element_type=jnp.float32)
    h = jnp.maximum(h + b1_ref[...], 0.0)
    acc_ref[...] += jnp.dot(h.astype(cdt), w2_ref[...],
                            preferred_element_type=jnp.float32)

    @pl.when(j == pl.num_programs(1) - 1)
    def _():
        o_ref[...] = (acc_ref[...] + b2_ref[...]).astype(o_ref.dtype)


# --------------------------------------------------------------------------
# Wrapper
# --------------------------------------------------------------------------

def feed_forward_network(x, w1, b1, w2, b2, *, tm=512, tf=1024,
                         compute_dtype=jnp.bfloat16, force_reduction=False):
    """x: (B, S, d_model) -> (B, S, d_model).  out = relu(x @ W1 + b1) @ W2 + b2.

    Weights are stored pre-transposed vs. torch nn.Linear:
      W1: (d_model, d_ff), W2: (d_ff, d_model).
    """
    B, S, d_model = x.shape
    d_ff = w1.shape[1]
    M = B * S

    cbytes = jnp.dtype(compute_dtype).itemsize
    xbytes = jnp.dtype(x.dtype).itemsize
    obytes = xbytes

    # ---- row tile selection --------------------------------------------------
    tm = min(tm, _round_up(M, 16))            # bf16 packs 2 rows / sublane
    if tm >= 256:
        tm = (tm // 256) * 256                # MXU-aligned on v6e/v7x
    if tm >= 512 and _cdiv(M, tm) < 2:
        tm = max(256, _round_up(_cdiv(M, 2), 256))   # >=2 tiles for v7x megacore

    # ---- generation-aware VMEM budget -----------------------------------------
    vmem_cap = _vmem_capacity_bytes()
    budget = (vmem_cap * 3) // 4              # ~96 MiB v5e/v6e, ~48 MiB v7x

    # ---- fast path: weights fully resident in VMEM ----------------------------
    weight_bytes = 2 * d_model * d_ff * cbytes + d_ff * 4 + d_model * 4
    resident_est = (weight_bytes
                    + 2 * tm * d_model * xbytes      # double-buffered x tiles
                    + 2 * tm * d_model * obytes      # double-buffered out tiles
                    + tm * d_ff * (4 + cbytes)       # hidden activation slab
                    + (2 << 20))                     # Mosaic internal scratch
    use_resident = (not force_reduction) and resident_est <= budget

    if use_resident:
        M_pad = _round_up(M, tm)
        x2d = x.reshape(M, d_model)
        if M_pad != M:
            x2d = jnp.pad(x2d, ((0, M_pad - M), (0, 0)))
        w1c = w1.astype(compute_dtype)               # no-op if pre-prepared
        w2c = w2.astype(compute_dtype)
        b1_2d = b1.astype(jnp.float32).reshape(1, d_ff)
        b2_2d = b2.astype(jnp.float32).reshape(1, d_model)

        vmem_limit = int(min(max(resident_est * 5 // 4, 32 << 20), vmem_cap))
        vmem_limit = max(vmem_limit, min(resident_est + (2 << 20), vmem_cap))

        cost = pl.CostEstimate(
            flops=4 * M * d_model * d_ff,
            transcendentals=0,
            bytes_accessed=(M_pad * d_model * xbytes
                            + 2 * d_model * d_ff * cbytes   # weights read once
                            + d_ff * 4 + d_model * 4
                            + M_pad * d_model * obytes))

        out2d = pl.pallas_call(
            ffn_resident_kernel,
            out_shape=jax.ShapeDtypeStruct((M_pad, d_model), x.dtype),
            grid_spec=pltpu.PrefetchScalarGridSpec(
                num_scalar_prefetch=0,
                grid=(M_pad // tm,),
                in_specs=[
                    pl.BlockSpec((tm, d_model), lambda i: (i, 0)),     # x rows
                    pl.BlockSpec((d_model, d_ff), lambda i: (0, 0)),   # W1 resident
                    pl.BlockSpec((1, d_ff), lambda i: (0, 0)),         # b1
                    pl.BlockSpec((d_ff, d_model), lambda i: (0, 0)),   # W2 resident
                    pl.BlockSpec((1, d_model), lambda i: (0, 0)),      # b2
                ],
                out_specs=pl.BlockSpec((tm, d_model), lambda i: (i, 0)),
            ),
            compiler_params=pltpu.CompilerParams(
                dimension_semantics=("parallel",),
                vmem_limit_bytes=vmem_limit,
            ),
            cost_estimate=cost,
        )(x2d, w1c, b1_2d, w2c, b2_2d)
        return out2d[:M].reshape(B, S, d_model)

    # ---- fallback path: stream weights, d_ff as trailing reduction axis -------
    tf = min(tf, _round_up(d_ff, 128))

    def reduce_est(tm_, tf_):
        return (2 * tm_ * d_model * xbytes        # x tiles
                + 2 * d_model * tf_ * cbytes      # W1 tiles
                + 2 * tf_ * d_model * cbytes      # W2 tiles
                + 2 * tf_ * 4 + 2 * d_model * 4   # bias tiles
                + 2 * tm_ * d_model * obytes      # out tiles
                + tm_ * d_model * 4               # f32 accumulator
                + tm_ * tf_ * (4 + cbytes)        # hidden slab
                + (2 << 20))

    while reduce_est(tm, tf) > budget and tf > 128:
        tf = max(128, _round_up(tf // 2, 128))
    while reduce_est(tm, tf) > budget and tm > 128:
        tm = max(128, _round_up(tm // 2, 16))

    M_pad = _round_up(M, tm)
    F_pad = _round_up(d_ff, tf)

    x2d = x.reshape(M, d_model)
    if M_pad != M:
        x2d = jnp.pad(x2d, ((0, M_pad - M), (0, 0)))
    w1c = w1.astype(compute_dtype)
    w2c = w2.astype(compute_dtype)
    b1f = b1.astype(jnp.float32)
    if F_pad != d_ff:
        w1c = jnp.pad(w1c, ((0, 0), (0, F_pad - d_ff)))
        w2c = jnp.pad(w2c, ((0, F_pad - d_ff), (0, 0)))
        b1f = jnp.pad(b1f, (0, F_pad - d_ff))
    b1_2d = b1f.reshape(1, F_pad)
    b2_2d = b2.astype(jnp.float32).reshape(1, d_model)

    est = reduce_est(tm, tf)
    vmem_limit = int(min(max(est * 5 // 4, 32 << 20), vmem_cap))
    vmem_limit = max(vmem_limit, min(est + (2 << 20), vmem_cap))

    n_row_tiles = M_pad // tm
    cost = pl.CostEstimate(
        flops=4 * M * d_model * d_ff,
        transcendentals=0,
        bytes_accessed=(M_pad * d_model * xbytes
                        + n_row_tiles * 2 * d_model * F_pad * cbytes  # re-streamed
                        + n_row_tiles * (F_pad * 4 + d_model * 4)
                        + M_pad * d_model * obytes))

    # TODO(synk): if profiling shows exposed weight DMA on v6e, deepen the W1/W2
    # pipelining with pipeline_mode=pl.Buffered(3) on their BlockSpecs.
    out2d = pl.pallas_call(
        ffn_reduce_kernel,
        out_shape=jax.ShapeDtypeStruct((M_pad, d_model), x.dtype),
        grid_spec=pltpu.PrefetchScalarGridSpec(
            num_scalar_prefetch=0,
            grid=(M_pad // tm, F_pad // tf),   # rows parallel, reduction last
            in_specs=[
                pl.BlockSpec((tm, d_model), lambda i, j: (i, 0)),   # x (resident over j)
                pl.BlockSpec((d_model, tf), lambda i, j: (0, j)),   # W1 column tile
                pl.BlockSpec((1, tf), lambda i, j: (0, j)),         # b1 tile
                pl.BlockSpec((tf, d_model), lambda i, j: (j, 0)),   # W2 row tile
                pl.BlockSpec((1, d_model), lambda i, j: (0, 0)),    # b2 (invariant)
            ],
            out_specs=pl.BlockSpec((tm, d_model), lambda i, j: (i, 0)),
            scratch_shapes=[pltpu.VMEM((tm, d_model), jnp.float32)],
        ),
        compiler_params=pltpu.CompilerParams(
            dimension_semantics=("parallel", "arbitrary"),
            vmem_limit_bytes=vmem_limit,
        ),
        cost_estimate=cost,
    )(x2d, w1c, b1_2d, w2c, b2_2d)
    return out2d[:M].reshape(B, S, d_model)


def reference_ffn(x, w1, b1, w2, b2):
    h = jnp.maximum(jnp.einsum("bsd,df->bsf", x, w1) + b1, 0.0)
    return jnp.einsum("bsf,fd->bsd", h, w2) + b2


if __name__ == "__main__":
    # Small shapes consistent with the module defaults (d_ff=2048).
    B, S, d_model, d_ff = 2, 8, 128, 2048

    key = jax.random.PRNGKey(0)
    kx, k1, k2, k3, k4 = jax.random.split(key, 5)

    x = jax.random.normal(kx, (B, S, d_model), dtype=jnp.float32)
    # nn.Linear parameters, stored transposed:
    #   linear1.weight: (d_ff, d_model) -> w1: (d_model, d_ff)
    #   linear2.weight: (d_model, d_ff) -> w2: (d_ff, d_model)
    w1 = jax.random.normal(k1, (d_model, d_ff), dtype=jnp.float32) * 0.02
    b1 = jax.random.normal(k2, (d_ff,), dtype=jnp.float32) * 0.02
    w2 = jax.random.normal(k3, (d_ff, d_model), dtype=jnp.float32) * 0.02
    b2 = jax.random.normal(k4, (d_model,), dtype=jnp.float32) * 0.02

    ref = reference_ffn(x, w1, b1, w2, b2)

    # One-time parameter prep (weights cast to bf16 once, not per forward call).
    w1c, b1c, w2c, b2c = prepare_ffn_params(w1, b1, w2, b2)

    # Fast path: full W1/W2 resident in VMEM, 1-D grid over row tiles.
    out_res = jax.block_until_ready(feed_forward_network(x, w1c, b1c, w2c, b2c))
    assert out_res.shape == (B, S, d_model)
    assert jnp.allclose(out_res, ref, atol=2.5e-2, rtol=2.5e-2), (
        float(jnp.max(jnp.abs(out_res - ref))))

    # Streaming path (forced), small tf so the reduction axis is exercised.
    out_red = jax.block_until_ready(
        feed_forward_network(x, w1c, b1c, w2c, b2c, tf=512, force_reduction=True))
    assert jnp.allclose(out_red, ref, atol=2.5e-2, rtol=2.5e-2), (
        float(jnp.max(jnp.abs(out_red - ref))))

    # Ragged row count to exercise row padding / slicing.
    x_odd = jax.random.normal(kx, (3, 5, d_model), dtype=jnp.float32)
    ref_odd = reference_ffn(x_odd, w1, b1, w2, b2)
    out_odd = jax.block_until_ready(feed_forward_network(x_odd, w1c, b1c, w2c, b2c))
    assert jnp.allclose(out_odd, ref_odd, atol=2.5e-2, rtol=2.5e-2), (
        float(jnp.max(jnp.abs(out_odd - ref_odd))))

    print("KERNEL_OK")
</pallas_src>

<mosaic_0001>
module attributes {stable_mosaic.version = 11 : i64} {
  func.func @ffn_resident_kernel(%arg0: i32, %arg1: memref<16x128xf32, #tpu.memory_space<vmem>>, %arg2: memref<128x2048xbf16, #tpu.memory_space<vmem>>, %arg3: memref<1x2048xf32, #tpu.memory_space<vmem>>, %arg4: memref<2048x128xbf16, #tpu.memory_space<vmem>>, %arg5: memref<1x128xf32, #tpu.memory_space<vmem>>, %arg6: memref<16x128xf32, #tpu.memory_space<vmem>>) attributes {dimension_semantics = [#tpu.dimension_semantics<parallel>], iteration_bounds = array<i64: 1>, scalar_prefetch = 0 : i64, scratch_operands = 0 : i64, tpu.core_type = #tpu.core_type<tc>, window_params = [{transform_indices = @transform_0, window_bounds = array<i64: 16, 128>}, {pipeline_mode = #tpu.pipeline_mode<synchronous>, transform_indices = @transform_1, window_bounds = array<i64: 128, 2048>}, {pipeline_mode = #tpu.pipeline_mode<synchronous>, transform_indices = @transform_2, window_bounds = array<i64: 1, 2048>}, {pipeline_mode = #tpu.pipeline_mode<synchronous>, transform_indices = @transform_3, window_bounds = array<i64: 2048, 128>}, {pipeline_mode = #tpu.pipeline_mode<synchronous>, transform_indices = @transform_4, window_bounds = array<i64: 1, 128>}, {transform_indices = @transform_5, window_bounds = array<i64: 16, 128>}]} {
    %c0 = arith.constant 0 : index
    %c0_0 = arith.constant 0 : index
    %0 = vector.load %arg1[%c0, %c0_0] : memref<16x128xf32, #tpu.memory_space<vmem>>, vector<16x128xf32>
    %1 = arith.truncf %0 : vector<16x128xf32> to vector<16x128xbf16>
    %c0_1 = arith.constant 0 : index
    %c0_2 = arith.constant 0 : index
    %2 = vector.load %arg2[%c0_1, %c0_2] : memref<128x2048xbf16, #tpu.memory_space<vmem>>, vector<128x2048xbf16>
    %cst = arith.constant dense<0.000000e+00> : vector<16x2048xf32>
    %3 = tpu.matmul %1, %2, %cst {dimension_numbers = #tpu.dot_dimension_numbers<[1], [0], [0], [1], [0, 0, 1, 1], [], []>} : vector<16x128xbf16>, vector<128x2048xbf16>, vector<16x2048xf32> -> vector<16x2048xf32>
    %c0_3 = arith.constant 0 : index
    %c0_4 = arith.constant 0 : index
    %4 = vector.load %arg3[%c0_3, %c0_4] : memref<1x2048xf32, #tpu.memory_space<vmem>>, vector<1x2048xf32>
    %5 = vector.broadcast %4 : vector<1x2048xf32> to vector<16x2048xf32>
    %6 = arith.addf %3, %5 : vector<16x2048xf32>
    %cst_5 = arith.constant 0.000000e+00 : f32
    %7 = vector.broadcast %cst_5 : f32 to vector<16x2048xf32>
    %8 = arith.maximumf %6, %7 : vector<16x2048xf32>
    %9 = arith.truncf %8 : vector<16x2048xf32> to vector<16x2048xbf16>
    %c0_6 = arith.constant 0 : index
    %c0_7 = arith.constant 0 : index
    %10 = vector.load %arg4[%c0_6, %c0_7] : memref<2048x128xbf16, #tpu.memory_space<vmem>>, vector<2048x128xbf16>
    %cst_8 = arith.constant dense<0.000000e+00> : vector<16x128xf32>
    %11 = tpu.matmul %9, %10, %cst_8 {dimension_numbers = #tpu.dot_dimension_numbers<[1], [0], [0], [1], [0, 0, 1, 1], [], []>} : vector<16x2048xbf16>, vector<2048x128xbf16>, vector<16x128xf32> -> vector<16x128xf32>
    %c0_9 = arith.constant 0 : index
    %c0_10 = arith.constant 0 : index
    %12 = vector.load %arg5[%c0_9, %c0_10] : memref<1x128xf32, #tpu.memory_space<vmem>>, vector<1x128xf32>
    %13 = vector.broadcast %12 : vector<1x128xf32> to vector<16x128xf32>
    %14 = arith.addf %11, %13 : vector<16x128xf32>
    %c0_11 = arith.constant 0 : index
    %c0_12 = arith.constant 0 : index
    %15 = vector.load %arg6[%c0_11, %c0_12] : memref<16x128xf32, #tpu.memory_space<vmem>>, vector<16x128xf32>
    tpu.vector_store %arg6[%c0_11, %c0_12], %14 {strides = array<i32>} : memref<16x128xf32, #tpu.memory_space<vmem>>, vector<16x128xf32>,
    return
  }
  func.func @transform_0(%arg0: i32) -> (i32, i32) {
    %c0_i32 = arith.constant 0 : i32
    %c0_i32_0 = arith.constant 0 : i32
    return %arg0, %c0_i32 : i32, i32
  }
  func.func @transform_1(%arg0: i32) -> (i32, i32) {
    %c0_i32 = arith.constant 0 : i32
    %c0_i32_0 = arith.constant 0 : i32
    %c0_i32_1 = arith.constant 0 : i32
    return %c0_i32, %c0_i32_0 : i32, i32
  }
  func.func @transform_2(%arg0: i32) -> (i32, i32) {
    %c0_i32 = arith.constant 0 : i32
    %c0_i32_0 = arith.constant 0 : i32
    %c0_i32_1 = arith.constant 0 : i32
    return %c0_i32, %c0_i32_0 : i32, i32
  }
  func.func @transform_3(%arg0: i32) -> (i32, i32) {
    %c0_i32 = arith.constant 0 : i32
    %c0_i32_0 = arith.constant 0 : i32
    %c0_i32_1 = arith.constant 0 : i32
    return %c0_i32, %c0_i32_0 : i32, i32
  }
  func.func @transform_4(%arg0: i32) -> (i32, i32) {
    %c0_i32 = arith.constant 0 : i32
    %c0_i32_0 = arith.constant 0 : i32
    %c0_i32_1 = arith.constant 0 : i32
    return %c0_i32, %c0_i32_0 : i32, i32
  }
  func.func @transform_5(%arg0: i32) -> (i32, i32) {
    %c0_i32 = arith.constant 0 : i32
    %c0_i32_0 = arith.constant 0 : i32
    return %arg0, %c0_i32 : i32, i32
  }
}

</mosaic_0001>

<llo_original>
// kernel: tpu_custom_call.1
$region0: #{tpu_custom_call.1}
  #allocation0 [shape = 'u32[]', space=smem, size = 0x4, offset = 0x4, fixed_abs, tag = 'smem constant byte address 0x4 - core index']
  #allocation1 [shape = 'u32[72,128]{1,0:T(1,128)}', space=vmem, size = 0x9000, scoped, tag = 'internal scratch']
  %s0 = inlined_call_operand.hbm [shape: f32[16,128], index: 0, kind: input, shape index: {}]
  %s1 = inlined_call_operand.hbm [shape: bf16[128,2048], index: 1, kind: input, shape index: {}]
  %s2 = inlined_call_operand.hbm [shape: f32[1,2048], index: 2, kind: input, shape index: {}]
  %s3 = inlined_call_operand.hbm [shape: bf16[2048,128], index: 3, kind: input, shape index: {}]
  %s4 = inlined_call_operand.vmem [shape: f32[1,128], index: 4, kind: input, shape index: {}]
  %s5 = inlined_call_operand.hbm [shape: f32[16,128], index: 5, kind: output, shape index: {}]
  %s6 = sld [smem:[#allocation0]]
  $region46: #{tpu_custom_call.1} parent=0
    _
  %s8 = ssub.s32 1, %s6
  %s9 = scalar_select 0, %s8, %s6
  $region1: #{tpu_custom_call.1} parent=0
    #allocation2 [shape = 'u8[8192]{0}', space=vmem, size = 0x2000, scoped, tag = 'input window, operand 0, single buffered']
    #allocation3 [shape = 's32[1]{0}', space=sflag, size = 0x4, scoped, tag = 'scoped memory for tpu_custom_call.1']
    #allocation4 [shape = 's32[1]{0}', space=sflag, size = 0x4, scoped, tag = 'scoped memory for tpu_custom_call.1']
    #allocation5 [shape = 'u8[524288]{0}', space=vmem, size = 0x80000, scoped, tag = 'input window, operand 1, single buffered']
    #allocation6 [shape = 's32[1]{0}', space=sflag, size = 0x4, scoped, tag = 'scoped memory for tpu_custom_call.1']
    #allocation7 [shape = 'u8[8192]{0}', space=vmem, size = 0x2000, scoped, tag = 'input window, operand 2, single buffered']
    #allocation8 [shape = 'u8[524288]{0}', space=vmem, size = 0x80000, scoped, tag = 'input window, operand 3, single buffered']
    #allocation9 [shape = 's32[1]{0}', space=sflag, size = 0x4, scoped, tag = 'scoped memory for tpu_custom_call.1']
    #allocation10 [shape = 'u8[8192]{0}', space=vmem, size = 0x2000, scoped, tag = 'output window, operand 0, single buffered']
    %10 = vsyncpa [#allocation3], 0
    %11 = vsyncpa [#allocation6], 0
    %12 = vsyncpa [#allocation9], 0
    %13 = vsyncpa [#allocation4], 0
    // Predicated region
    $region2: #{tpu_custom_call.1} parent=1 // pred_check
      _
    $region3: #{tpu_custom_call.1} parent=1 // pred_check_branch
      %15 = sbr.rel (0) target = $region5
    $region4: #{tpu_custom_call.1} parent=1 // pred_region
      %17 = vsyncadd [#allocation3], 0
      %s18 = sshll.u32 %s0, 4
      %s19 = int_to_ptr.hbm [resolvable:$true] %s18
      %s20 = sshll.u32 [#allocation2], 4
      %s21 = int_to_ptr.vmem [resolvable:$true] %s20
      %26 = dma.hbm_to_vmem [thread:$0]  %s19, 256, %s21, [#allocation3], 128, 128, 8
    $region5: #{tpu_custom_call.1} parent=1 // pred_fallthru
      _
    // Predicated region
    $region6: #{tpu_custom_call.1} parent=1 // pred_check
      _
    $region7: #{tpu_custom_call.1} parent=1 // pred_check_branch
      %28 = sbr.rel (0) target = $region9
    $region8: #{tpu_custom_call.1} parent=1 // pred_region
      %30 = vsyncadd [#allocation6], 0
      %s31 = sshll.u32 %s1, 4
      %s32 = int_to_ptr.hbm [resolvable:$true] %s31
      %s33 = sshll.u32 [#allocation5], 4
      %s34 = int_to_ptr.vmem [resolvable:$true] %s33
      %39 = dma.hbm_to_vmem [thread:$0]  %s32, 16384, %s34, [#allocation6], 1024, 1024, 64
    $region9: #{tpu_custom_call.1} parent=1 // pred_fallthru
      _
    // Predicated region
    $region10: #{tpu_custom_call.1} parent=1 // pred_check
      _
    $region11: #{tpu_custom_call.1} parent=1 // pred_check_branch
      %41 = sbr.rel (0) target = $region13
    $region12: #{tpu_custom_call.1} parent=1 // pred_region
      %43 = vsyncadd [#allocation6], 0
      %s45 = sshll.u32 %s2, 4
      %s46 = int_to_ptr.hbm [resolvable:$true] %s45
      %s47 = sshll.u32 [#allocation7], 4
      %s48 = int_to_ptr.vmem [resolvable:$true] %s47
      %50 = dma.hbm_to_vmem [thread:$0]  %s46, 256, %s48, [#allocation6]
    $region13: #{tpu_custom_call.1} parent=1 // pred_fallthru
      _
    // Predicated region
    $region14: #{tpu_custom_call.1} parent=1 // pred_check
      _
    $region15: #{tpu_custom_call.1} parent=1 // pred_check_branch
      %52 = sbr.rel (0) target = $region17
    $region16: #{tpu_custom_call.1} parent=1 // pred_region
      %54 = vsyncadd [#allocation9], 0
      %s55 = sshll.u32 %s3, 4
      %s56 = int_to_ptr.hbm [resolvable:$true] %s55
      %s57 = sshll.u32 [#allocation8], 4
      %s58 = int_to_ptr.vmem [resolvable:$true] %s57
      %63 = dma.hbm_to_vmem [thread:$0]  %s56, 16384, %s58, [#allocation9], 64, 64, 4
    $region17: #{tpu_custom_call.1} parent=1 // pred_fallthru
      _
    // Predicated region
    $region18: #{tpu_custom_call.1} parent=1 // pred_check
      _
    $region19: #{tpu_custom_call.1} parent=1 // pred_check_branch
      %65 = sbr.rel (0) target = $region21
    $region20: #{tpu_custom_call.1} parent=1 // pred_region
      _
    $region21: #{tpu_custom_call.1} parent=1 // pred_fallthru
      _
    // Predicated region
    $region22: #{tpu_custom_call.1} parent=1 // pred_check
      _
    $region23: #{tpu_custom_call.1} parent=1 // pred_check_branch
      %67 = sbr.rel (0) target = $region25
    $region24: #{tpu_custom_call.1} parent=1 // pred_region
      %69 = dma.done [#allocation3], 256
    $region25: #{tpu_custom_call.1} parent=1 // pred_fallthru
      _
    // Predicated region
    $region26: #{tpu_custom_call.1} parent=1 // pred_check
      _
    $region27: #{tpu_custom_call.1} parent=1 // pred_check_branch
      %71 = sbr.rel (0) target = $region29
    $region28: #{tpu_custom_call.1} parent=1 // pred_region
      %73 = dma.done [#allocation6], 16384
    $region29: #{tpu_custom_call.1} parent=1 // pred_fallthru
      _
    // Predicated region
    $region30: #{tpu_custom_call.1} parent=1 // pred_check
      _
    $region31: #{tpu_custom_call.1} parent=1 // pred_check_branch
      %75 = sbr.rel (0) target = $region33
    $region32: #{tpu_custom_call.1} parent=1 // pred_region
      %77 = dma.done [#allocation6], 256
    $region33: #{tpu_custom_call.1} parent=1 // pred_fallthru
      _
    // Predicated region
    $region34: #{tpu_custom_call.1} parent=1 // pred_check
      _
    $region35: #{tpu_custom_call.1} parent=1 // pred_check_branch
      %79 = sbr.rel (0) target = $region37
    $region36: #{tpu_custom_call.1} parent=1 // pred_region
      %81 = dma.done [#allocation9], 16384
    $region37: #{tpu_custom_call.1} parent=1 // pred_fallthru
      _
    %v82 = vld [vmem:[#allocation2] sm:$0xff]
    %v83 = vld [vmem:[#allocation2 + $0x8] sm:$0xff]
    %v84 = vpack.c.bf16 %v83, %v82
    %v85 = vld [vmem:[#allocation5] sm:$0xff]
    %v86 = vld [vmem:[#allocation5 + $0x8] sm:$0xff]
    %v87 = vld [vmem:[#allocation5 + $0x10] sm:$0xff]
    %v88 = vld [vmem:[#allocation5 + $0x18] sm:$0xff]
    %v89 = vld [vmem:[#allocation5 + $0x20] sm:$0xff]
    %v90 = vld [vmem:[#allocation5 + $0x28] sm:$0xff]
    %v91 = vld [vmem:[#allocation5 + $0x30] sm:$0xff]
    %v92 = vld [vmem:[#allocation5 + $0x38] sm:$0xff]
    %v93 = vld [vmem:[#allocation5 + $0x40] sm:$0xff]
    %v94 = vld [vmem:[#allocation5 + $0x48] sm:$0xff]
    %v95 = vld [vmem:[#allocation5 + $0x50] sm:$0xff]
    %v96 = vld [vmem:[#allocation5 + $0x58] sm:$0xff]
    %v97 = vld [vmem:[#allocation5 + $0x60] sm:$0xff]
    %v98 = vld [vmem:[#allocation5 + $0x68] sm:$0xff]
    %v99 = vld [vmem:[#allocation5 + $0x70] sm:$0xff]
    %v100 = vld [vmem:[#allocation5 + $0x78] sm:$0xff]
    %v101 = vld [vmem:[#allocation5 + $0x80] sm:$0xff]
    %v102 = vld [vmem:[#allocation5 + $0x88] sm:$0xff]
    %v103 = vld [vmem:[#allocation5 + $0x90] sm:$0xff]
    %v104 = vld [vmem:[#allocation5 + $0x98] sm:$0xff]
    %v105 = vld [vmem:[#allocation5 + $0xa0] sm:$0xff]
    %v106 = vld [vmem:[#allocation5 + $0xa8] sm:$0xff]
    %v107 = vld [vmem:[#allocation5 + $0xb0] sm:$0xff]
    %v108 = vld [vmem:[#allocation5 + $0xb8] sm:$0xff]
    %v109 = vld [vmem:[#allocation5 + $0xc0] sm:$0xff]
    %v110 = vld [vmem:[#allocation5 + $0xc8] sm:$0xff]
    %v111 = vld [vmem:[#allocation5 + $0xd0] sm:$0xff]
    %v112 = vld [vmem:[#allocation5 + $0xd8] sm:$0xff]
    %v113 = vld [vmem:[#allocation5 + $0xe0] sm:$0xff]
    %v114 = vld [vmem:[#allocation5 + $0xe8] sm:$0xff]
    %v115 = vld [vmem:[#allocation5 + $0xf0] sm:$0xff]
    %v116 = vld [vmem:[#allocation5 + $0xf8] sm:$0xff]
    %v117 = vld [vmem:[#allocation5 + $0x100] sm:$0xff]
    %v118 = vld [vmem:[#allocation5 + $0x108] sm:$0xff]
    %v119 = vld [vmem:[#allocation5 + $0x110] sm:$0xff]
    %v120 = vld [vmem:[#allocation5 + $0x118] sm:$0xff]
    %v121 = vld [vmem:[#allocation5 + $0x120] sm:$0xff]
    %v122 = vld [vmem:[#allocation5 + $0x128] sm:$0xff]
    %v123 = vld [vmem:[#allocation5 + $0x130] sm:$0xff]
    %v124 = vld [vmem:[#allocation5 + $0x138] sm:$0xff]
    %v125 = vld [vmem:[#allocation5 + $0x140] sm:$0xff]
    %v126 = vld [vmem:[#allocation5 + $0x148] sm:$0xff]
    %v127 = vld [vmem:[#allocation5 + $0x150] sm:$0xff]
    %v128 = vld [vmem:[#allocation5 + $0x158] sm:$0xff]
    %v129 = vld [vmem:[#allocation5 + $0x160] sm:$0xff]
    %v130 = vld [vmem:[#allocation5 + $0x168] sm:$0xff]
    %v131 = vld [vmem:[#allocation5 + $0x170] sm:$0xff]
    %v132 = vld [vmem:[#allocation5 + $0x178] sm:$0xff]
    %v133 = vld [vmem:[#allocation5 + $0x180] sm:$0xff]
    %v134 = vld [vmem:[#allocation5 + $0x188] sm:$0xff]
    %v135 = vld [vmem:[#allocation5 + $0x190] sm:$0xff]
    %v136 = vld [vmem:[#allocation5 + $0x198] sm:$0xff]
    %v137 = vld [vmem:[#allocation5 + $0x1a0] sm:$0xff]
    %v138 = vld [vmem:[#allocation5 + $0x1a8] sm:$0xff]
    %v139 = vld [vmem:[#allocation5 + $0x1b0] sm:$0xff]
    %v140 = vld [vmem:[#allocation5 + $0x1b8] sm:$0xff]
    %v141 = vld [vmem:[#allocation5 + $0x1c0] sm:$0xff]
    %v142 = vld [vmem:[#allocation5 + $0x1c8] sm:$0xff]
    %v143 = vld [vmem:[#allocation5 + $0x1d0] sm:$0xff]
    %v144 = vld [vmem:[#allocation5 + $0x1d8] sm:$0xff]
    %v145 = vld [vmem:[#allocation5 + $0x1e0] sm:$0xff]
    %v146 = vld [vmem:[#allocation5 + $0x1e8] sm:$0xff]
    %v147 = vld [vmem:[#allocation5 + $0x1f0] sm:$0xff]
    %v148 = vld [vmem:[#allocation5 + $0x1f8] sm:$0xff]
    %v149 = vld [vmem:[#allocation5 + $0x200] sm:$0xff]
    %v150 = vld [vmem:[#allocation5 + $0x208] sm:$0xff]
    %v151 = vld [vmem:[#allocation5 + $0x210] sm:$0xff]
    %v152 = vld [vmem:[#allocation5 + $0x218] sm:$0xff]
    %v153 = vld [vmem:[#allocation5 + $0x220] sm:$0xff]
    %v154 = vld [vmem:[#allocation5 + $0x228] sm:$0xff]
    %v155 = vld [vmem:[#allocation5 + $0x230] sm:$0xff]
    %v156 = vld [vmem:[#allocation5 + $0x238] sm:$0xff]
    %v157 = vld [vmem:[#allocation5 + $0x240] sm:$0xff]
    %v158 = vld [vmem:[#allocation5 + $0x248] sm:$0xff]
    %v159 = vld [vmem:[#allocation5 + $0x250] sm:$0xff]
    %v160 = vld [vmem:[#allocation5 + $0x258] sm:$0xff]
    %v161 = vld [vmem:[#allocation5 + $0x260] sm:$0xff]
    %v162 = vld [vmem:[#allocation5 + $0x268] sm:$0xff]
    %v163 = vld [vmem:[#allocation5 + $0x270] sm:$0xff]
    %v164 = vld [vmem:[#allocation5 + $0x278] sm:$0xff]
    %v165 = vld [vmem:[#allocation5 + $0x280] sm:$0xff]
    %v166 = vld [vmem:[#allocation5 + $0x288] sm:$0xff]
    %v167 = vld [vmem:[#allocation5 + $0x290] sm:$0xff]
    %v168 = vld [vmem:[#allocation5 + $0x298] sm:$0xff]
    %v169 = vld [vmem:[#allocation5 + $0x2a0] sm:$0xff]
    %v170 = vld [vmem:[#allocation5 + $0x2a8] sm:$0xff]
    %v171 = vld [vmem:[#allocation5 + $0x2b0] sm:$0xff]
    %v172 = vld [vmem:[#allocation5 + $0x2b8] sm:$0xff]
    %v173 = vld [vmem:[#allocation5 + $0x2c0] sm:$0xff]
    %v174 = vld [vmem:[#allocation5 + $0x2c8] sm:$0xff]
    %v175 = vld [vmem:[#allocation5 + $0x2d0] sm:$0xff]
    %v176 = vld [vmem:[#allocation5 + $0x2d8] sm:$0xff]
    %v177 = vld [vmem:[#allocation5 + $0x2e0] sm:$0xff]
    %v178 = vld [vmem:[#allocation5 + $0x2e8] sm:$0xff]
    %v179 = vld [vmem:[#allocation5 + $0x2f0] sm:$0xff]
    %v180 = vld [vmem:[#allocation5 + $0x2f8] sm:$0xff]
    %v181 = vld [vmem:[#allocation5 + $0x300] sm:$0xff]
    %v182 = vld [vmem:[#allocation5 + $0x308] sm:$0xff]
    %v183 = vld [vmem:[#allocation5 + $0x310] sm:$0xff]
    %v184 = vld [vmem:[#allocation5 + $0x318] sm:$0xff]
    %v185 = vld [vmem:[#allocation5 + $0x320] sm:$0xff]
    %v186 = vld [vmem:[#allocation5 + $0x328] sm:$0xff]
    %v187 = vld [vmem:[#allocation5 + $0x330] sm:$0xff]
    %v188 = vld [vmem:[#allocation5 + $0x338] sm:$0xff]
    %v189 = vld [vmem:[#allocation5 + $0x340] sm:$0xff]
    %v190 = vld [vmem:[#allocation5 + $0x348] sm:$0xff]
    %v191 = vld [vmem:[#allocation5 + $0x350] sm:$0xff]
    %v192 = vld [vmem:[#allocation5 + $0x358] sm:$0xff]
    %v193 = vld [vmem:[#allocation5 + $0x360] sm:$0xff]
    %v194 = vld [vmem:[#allocation5 + $0x368] sm:$0xff]
    %v195 = vld [vmem:[#allocation5 + $0x370] sm:$0xff]
    %v196 = vld [vmem:[#allocation5 + $0x378] sm:$0xff]
    %v197 = vld [vmem:[#allocation5 + $0x380] sm:$0xff]
    %v198 = vld [vmem:[#allocation5 + $0x388] sm:$0xff]
    %v199 = vld [vmem:[#allocation5 + $0x390] sm:$0xff]
    %v200 = vld [vmem:[#allocation5 + $0x398] sm:$0xff]
    %v201 = vld [vmem:[#allocation5 + $0x3a0] sm:$0xff]
    %v202 = vld [vmem:[#allocation5 + $0x3a8] sm:$0xff]
    %v203 = vld [vmem:[#allocation5 + $0x3b0] sm:$0xff]
    %v204 = vld [vmem:[#allocation5 + $0x3b8] sm:$0xff]
    %v205 = vld [vmem:[#allocation5 + $0x3c0] sm:$0xff]
    %v206 = vld [vmem:[#allocation5 + $0x3c8] sm:$0xff]
    %v207 = vld [vmem:[#allocation5 + $0x3d0] sm:$0xff]
    %v208 = vld [vmem:[#allocation5 + $0x3d8] sm:$0xff]
    %v209 = vld [vmem:[#allocation5 + $0x3e0] sm:$0xff]
    %v210 = vld [vmem:[#allocation5 + $0x3e8] sm:$0xff]
    %v211 = vld [vmem:[#allocation5 + $0x3f0] sm:$0xff]
    %v212 = vld [vmem:[#allocation5 + $0x3f8] sm:$0xff]
    %v213 = vld [vmem:[#allocation7] sm:$0xff]
    %v214 = vld [vmem:[#allocation7 + $0x8] sm:$0xff]
    %v217 = vperm.slane %v213, 0
    %v218 = vperm.slane %v213, 1
    %v219 = vperm.slane %v213, 2
    %v220 = vperm.slane %v213, 3
    %v221 = vperm.slane %v213, 4
    %v222 = vperm.slane %v213, 5
    %v223 = vperm.slane %v213, 6
    %v224 = vperm.slane %v213, 7
    %v225 = vperm.slane %v214, 0
    %v226 = vperm.slane %v214, 1
    %v227 = vperm.slane %v214, 2
    %v228 = vperm.slane %v214, 3
    %v229 = vperm.slane %v214, 4
    %v230 = vperm.slane %v214, 5
    %v231 = vperm.slane %v214, 6
    %v232 = vperm.slane %v214, 7
    %v377 = vunpack.c.l.b16 %v85
    %v378 = vunpack.c.h.b16 %v85
    %v379 = vunpack.c.l.b16 %v86
    %v380 = vunpack.c.h.b16 %v86
    %v381 = vunpack.c.l.b16 %v87
    %v382 = vunpack.c.h.b16 %v87
    %v383 = vunpack.c.l.b16 %v88
    %v384 = vunpack.c.h.b16 %v88
    %v385 = vunpack.c.l.b16 %v89
    %v386 = vunpack.c.h.b16 %v89
    %v387 = vunpack.c.l.b16 %v90
    %v388 = vunpack.c.h.b16 %v90
    %v389 = vunpack.c.l.b16 %v91
    %v390 = vunpack.c.h.b16 %v91
    %v391 = vunpack.c.l.b16 %v92
    %v392 = vunpack.c.h.b16 %v92
    %v393 = vunpack.c.l.b16 %v93
    %v394 = vunpack.c.h.b16 %v93
    %v395 = vunpack.c.l.b16 %v94
    %v396 = vunpack.c.h.b16 %v94
    %v397 = vunpack.c.l.b16 %v95
    %v398 = vunpack.c.h.b16 %v95
    %v399 = vunpack.c.l.b16 %v96
    %v400 = vunpack.c.h.b16 %v96
    %v401 = vunpack.c.l.b16 %v97
    %v402 = vunpack.c.h.b16 %v97
    %v403 = vunpack.c.l.b16 %v98
    %v404 = vunpack.c.h.b16 %v98
    %v405 = vunpack.c.l.b16 %v99
    %v406 = vunpack.c.h.b16 %v99
    %v407 = vunpack.c.l.b16 %v100
    %v408 = vunpack.c.h.b16 %v100
    %v409 = vunpack.c.l.b16 %v101
    %v410 = vunpack.c.h.b16 %v101
    %v411 = vunpack.c.l.b16 %v102
    %v412 = vunpack.c.h.b16 %v102
    %v413 = vunpack.c.l.b16 %v103
    %v414 = vunpack.c.h.b16 %v103
    %v415 = vunpack.c.l.b16 %v104
    %v416 = vunpack.c.h.b16 %v104
    %v417 = vunpack.c.l.b16 %v105
    %v418 = vunpack.c.h.b16 %v105
    %v419 = vunpack.c.l.b16 %v106
    %v420 = vunpack.c.h.b16 %v106
    %v421 = vunpack.c.l.b16 %v107
    %v422 = vunpack.c.h.b16 %v107
    %v423 = vunpack.c.l.b16 %v108
    %v424 = vunpack.c.h.b16 %v108
    %v425 = vunpack.c.l.b16 %v109
    %v426 = vunpack.c.h.b16 %v109
    %v427 = vunpack.c.l.b16 %v110
    %v428 = vunpack.c.h.b16 %v110
    %v429 = vunpack.c.l.b16 %v111
    %v430 = vunpack.c.h.b16 %v111
    %v431 = vunpack.c.l.b16 %v112
    %v432 = vunpack.c.h.b16 %v112
    %v433 = vunpack.c.l.b16 %v113
    %v434 = vunpack.c.h.b16 %v113
    %v435 = vunpack.c.l.b16 %v114
    %v436 = vunpack.c.h.b16 %v114
    %v437 = vunpack.c.l.b16 %v115
    %v438 = vunpack.c.h.b16 %v115
    %v439 = vunpack.c.l.b16 %v116
    %v440 = vunpack.c.h.b16 %v116
    %v441 = vunpack.c.l.b16 %v117
    %v442 = vunpack.c.h.b16 %v117
    %v443 = vunpack.c.l.b16 %v118
    %v444 = vunpack.c.h.b16 %v118
    %v445 = vunpack.c.l.b16 %v119
    %v446 = vunpack.c.h.b16 %v119
    %v447 = vunpack.c.l.b16 %v120
    %v448 = vunpack.c.h.b16 %v120
    %v449 = vunpack.c.l.b16 %v121
    %v450 = vunpack.c.h.b16 %v121
    %v451 = vunpack.c.l.b16 %v122
    %v452 = vunpack.c.h.b16 %v122
    %v453 = vunpack.c.l.b16 %v123
    %v454 = vunpack.c.h.b16 %v123
    %v455 = vunpack.c.l.b16 %v124
    %v456 = vunpack.c.h.b16 %v124
    %v457 = vunpack.c.l.b16 %v125
    %v458 = vunpack.c.h.b16 %v125
    %v459 = vunpack.c.l.b16 %v126
    %v460 = vunpack.c.h.b16 %v126
    %v461 = vunpack.c.l.b16 %v127
    %v462 = vunpack.c.h.b16 %v127
    %v463 = vunpack.c.l.b16 %v128
    %v464 = vunpack.c.h.b16 %v128
    %v465 = vunpack.c.l.b16 %v129
    %v466 = vunpack.c.h.b16 %v129
    %v467 = vunpack.c.l.b16 %v130
    %v468 = vunpack.c.h.b16 %v130
    %v469 = vunpack.c.l.b16 %v131
    %v470 = vunpack.c.h.b16 %v131
    %v471 = vunpack.c.l.b16 %v132
    %v472 = vunpack.c.h.b16 %v132
    %v473 = vunpack.c.l.b16 %v133
    %v474 = vunpack.c.h.b16 %v133
    %v475 = vunpack.c.l.b16 %v134
    %v476 = vunpack.c.h.b16 %v134
    %v477 = vunpack.c.l.b16 %v135
    %v478 = vunpack.c.h.b16 %v135
    %v479 = vunpack.c.l.b16 %v136
    %v480 = vunpack.c.h.b16 %v136
    %v481 = vunpack.c.l.b16 %v137
    %v482 = vunpack.c.h.b16 %v137
    %v483 = vunpack.c.l.b16 %v138
    %v484 = vunpack.c.h.b16 %v138
    %v485 = vunpack.c.l.b16 %v139
    %v486 = vunpack.c.h.b16 %v139
    %v487 = vunpack.c.l.b16 %v140
    %v488 = vunpack.c.h.b16 %v140
    %v489 = vunpack.c.l.b16 %v141
    %v490 = vunpack.c.h.b16 %v141
    %v491 = vunpack.c.l.b16 %v142
    %v492 = vunpack.c.h.b16 %v142
    %v493 = vunpack.c.l.b16 %v143
    %v494 = vunpack.c.h.b16 %v143
    %v495 = vunpack.c.l.b16 %v144
    %v496 = vunpack.c.h.b16 %v144
    %v497 = vunpack.c.l.b16 %v145
    %v498 = vunpack.c.h.b16 %v145
    %v499 = vunpack.c.l.b16 %v146
    %v500 = vunpack.c.h.b16 %v146
    %v501 = vunpack.c.l.b16 %v147
    %v502 = vunpack.c.h.b16 %v147
    %v503 = vunpack.c.l.b16 %v148
    %v504 = vunpack.c.h.b16 %v148
    %v505 = vunpack.c.l.b16 %v149
    %v506 = vunpack.c.h.b16 %v149
    %v507 = vunpack.c.l.b16 %v150
    %v508 = vunpack.c.h.b16 %v150
    %v509 = vunpack.c.l.b16 %v151
    %v510 = vunpack.c.h.b16 %v151
    %v511 = vunpack.c.l.b16 %v152
    %v512 = vunpack.c.h.b16 %v152
    %v513 = vunpack.c.l.b16 %v153
    %v514 = vunpack.c.h.b16 %v153
    %v515 = vunpack.c.l.b16 %v154
    %v516 = vunpack.c.h.b16 %v154
    %v517 = vunpack.c.l.b16 %v155
    %v518 = vunpack.c.h.b16 %v155
    %v519 = vunpack.c.l.b16 %v156
    %v520 = vunpack.c.h.b16 %v156
    %v521 = vunpack.c.l.b16 %v157
    %v522 = vunpack.c.h.b16 %v157
    %v523 = vunpack.c.l.b16 %v158
    %v524 = vunpack.c.h.b16 %v158
    %v525 = vunpack.c.l.b16 %v159
    %v526 = vunpack.c.h.b16 %v159
    %v527 = vunpack.c.l.b16 %v160
    %v528 = vunpack.c.h.b16 %v160
    %v529 = vunpack.c.l.b16 %v161
    %v530 = vunpack.c.h.b16 %v161
    %v531 = vunpack.c.l.b16 %v162
    %v532 = vunpack.c.h.b16 %v162
    %v533 = vunpack.c.l.b16 %v163
    %v534 = vunpack.c.h.b16 %v163
    %v535 = vunpack.c.l.b16 %v164
    %v536 = vunpack.c.h.b16 %v164
    %v537 = vunpack.c.l.b16 %v165
    %v538 = vunpack.c.h.b16 %v165
    %v539 = vunpack.c.l.b16 %v166
    %v540 = vunpack.c.h.b16 %v166
    %v541 = vunpack.c.l.b16 %v167
    %v542 = vunpack.c.h.b16 %v167
    %v543 = vunpack.c.l.b16 %v168
    %v544 = vunpack.c.h.b16 %v168
    %v545 = vunpack.c.l.b16 %v169
    %v546 = vunpack.c.h.b16 %v169
    %v547 = vunpack.c.l.b16 %v170
    %v548 = vunpack.c.h.b16 %v170
    %v549 = vunpack.c.l.b16 %v171
    %v550 = vunpack.c.h.b16 %v171
    %v551 = vunpack.c.l.b16 %v172
    %v552 = vunpack.c.h.b16 %v172
    %v553 = vunpack.c.l.b16 %v173
    %v554 = vunpack.c.h.b16 %v173
    %v555 = vunpack.c.l.b16 %v174
    %v556 = vunpack.c.h.b16 %v174
    %v557 = vunpack.c.l.b16 %v175
    %v558 = vunpack.c.h.b16 %v175
    %v559 = vunpack.c.l.b16 %v176
    %v560 = vunpack.c.h.b16 %v176
    %v561 = vunpack.c.l.b16 %v177
    %v562 = vunpack.c.h.b16 %v177
    %v563 = vunpack.c.l.b16 %v178
    %v564 = vunpack.c.h.b16 %v178
    %v565 = vunpack.c.l.b16 %v179
    %v566 = vunpack.c.h.b16 %v179
    %v567 = vunpack.c.l.b16 %v180
    %v568 = vunpack.c.h.b16 %v180
    %v569 = vunpack.c.l.b16 %v181
    %v570 = vunpack.c.h.b16 %v181
    %v571 = vunpack.c.l.b16 %v182
    %v572 = vunpack.c.h.b16 %v182
    %v573 = vunpack.c.l.b16 %v183
    %v574 = vunpack.c.h.b16 %v183
    %v575 = vunpack.c.l.b16 %v184
    %v576 = vunpack.c.h.b16 %v184
    %v577 = vunpack.c.l.b16 %v185
    %v578 = vunpack.c.h.b16 %v185
    %v579 = vunpack.c.l.b16 %v186
    %v580 = vunpack.c.h.b16 %v186
    %v581 = vunpack.c.l.b16 %v187
    %v582 = vunpack.c.h.b16 %v187
    %v583 = vunpack.c.l.b16 %v188
    %v584 = vunpack.c.h.b16 %v188
    %v585 = vunpack.c.l.b16 %v189
    %v586 = vunpack.c.h.b16 %v189
    %v587 = vunpack.c.l.b16 %v190
    %v588 = vunpack.c.h.b16 %v190
    %v589 = vunpack.c.l.b16 %v191
    %v590 = vunpack.c.h.b16 %v191
    %v591 = vunpack.c.l.b16 %v192
    %v592 = vunpack.c.h.b16 %v192
    %v593 = vunpack.c.l.b16 %v193
    %v594 = vunpack.c.h.b16 %v193
    %v595 = vunpack.c.l.b16 %v194
    %v596 = vunpack.c.h.b16 %v194
    %v597 = vunpack.c.l.b16 %v195
    %v598 = vunpack.c.h.b16 %v195
    %v599 = vunpack.c.l.b16 %v196
    %v600 = vunpack.c.h.b16 %v196
    %v601 = vunpack.c.l.b16 %v197
    %v602 = vunpack.c.h.b16 %v197
    %v603 = vunpack.c.l.b16 %v198
    %v604 = vunpack.c.h.b16 %v198
    %v605 = vunpack.c.l.b16 %v199
    %v606 = vunpack.c.h.b16 %v199
    %v607 = vunpack.c.l.b16 %v200
    %v608 = vunpack.c.h.b16 %v200
    %v609 = vunpack.c.l.b16 %v201
    %v610 = vunpack.c.h.b16 %v201
    %v611 = vunpack.c.l.b16 %v202
    %v612 = vunpack.c.h.b16 %v202
    %v613 = vunpack.c.l.b16 %v203
    %v614 = vunpack.c.h.b16 %v203
    %v615 = vunpack.c.l.b16 %v204
    %v616 = vunpack.c.h.b16 %v204
    %v617 = vunpack.c.l.b16 %v205
    %v618 = vunpack.c.h.b16 %v205
    %v619 = vunpack.c.l.b16 %v206
    %v620 = vunpack.c.h.b16 %v206
    %v621 = vunpack.c.l.b16 %v207
    %v622 = vunpack.c.h.b16 %v207
    %v623 = vunpack.c.l.b16 %v208
    %v624 = vunpack.c.h.b16 %v208
    %v625 = vunpack.c.l.b16 %v209
    %v626 = vunpack.c.h.b16 %v209
    %v627 = vunpack.c.l.b16 %v210
    %v628 = vunpack.c.h.b16 %v210
    %v629 = vunpack.c.l.b16 %v211
    %v630 = vunpack.c.h.b16 %v211
    %v631 = vunpack.c.l.b16 %v212
    %v632 = vunpack.c.h.b16 %v212
    %v633 = vpack.c.b16 %v393, %v377
    %v634 = vpack.c.b16 %v394, %v378
    %v635 = vpack.c.b16 %v395, %v379
    %v636 = vpack.c.b16 %v396, %v380
    %v637 = vpack.c.b16 %v397, %v381
    %v638 = vpack.c.b16 %v398, %v382
    %v639 = vpack.c.b16 %v399, %v383
    %v640 = vpack.c.b16 %v400, %v384
    %v641 = vpack.c.b16 %v401, %v385
    %v642 = vpack.c.b16 %v402, %v386
    %v643 = vpack.c.b16 %v403, %v387
    %v644 = vpack.c.b16 %v404, %v388
    %v645 = vpack.c.b16 %v405, %v389
    %v646 = vpack.c.b16 %v406, %v390
    %v647 = vpack.c.b16 %v407, %v391
    %v648 = vpack.c.b16 %v408, %v392
    %v649 = vpack.c.b16 %v425, %v409
    %v650 = vpack.c.b16 %v426, %v410
    %v651 = vpack.c.b16 %v427, %v411
    %v652 = vpack.c.b16 %v428, %v412
    %v653 = vpack.c.b16 %v429, %v413
    %v654 = vpack.c.b16 %v430, %v414
    %v655 = vpack.c.b16 %v431, %v415
    %v656 = vpack.c.b16 %v432, %v416
    %v657 = vpack.c.b16 %v433, %v417
    %v658 = vpack.c.b16 %v434, %v418
    %v659 = vpack.c.b16 %v435, %v419
    %v660 = vpack.c.b16 %v436, %v420
    %v661 = vpack.c.b16 %v437, %v421
    %v662 = vpack.c.b16 %v438, %v422
    %v663 = vpack.c.b16 %v439, %v423
    %v664 = vpack.c.b16 %v440, %v424
    %v665 = vpack.c.b16 %v457, %v441
    %v666 = vpack.c.b16 %v458, %v442
    %v667 = vpack.c.b16 %v459, %v443
    %v668 = vpack.c.b16 %v460, %v444
    %v669 = vpack.c.b16 %v461, %v445
    %v670 = vpack.c.b16 %v462, %v446
    %v671 = vpack.c.b16 %v463, %v447
    %v672 = vpack.c.b16 %v464, %v448
    %v673 = vpack.c.b16 %v465, %v449
    %v674 = vpack.c.b16 %v466, %v450
    %v675 = vpack.c.b16 %v467, %v451
    %v676 = vpack.c.b16 %v468, %v452
    %v677 = vpack.c.b16 %v469, %v453
    %v678 = vpack.c.b16 %v470, %v454
    %v679 = vpack.c.b16 %v471, %v455
    %v680 = vpack.c.b16 %v472, %v456
    %v681 = vpack.c.b16 %v489, %v473
    %v682 = vpack.c.b16 %v490, %v474
    %v683 = vpack.c.b16 %v491, %v475
    %v684 = vpack.c.b16 %v492, %v476
    %v685 = vpack.c.b16 %v493, %v477
    %v686 = vpack.c.b16 %v494, %v478
    %v687 = vpack.c.b16 %v495, %v479
    %v688 = vpack.c.b16 %v496, %v480
    %v689 = vpack.c.b16 %v497, %v481
    %v690 = vpack.c.b16 %v498, %v482
    %v691 = vpack.c.b16 %v499, %v483
    %v692 = vpack.c.b16 %v500, %v484
    %v693 = vpack.c.b16 %v501, %v485
    %v694 = vpack.c.b16 %v502, %v486
    %v695 = vpack.c.b16 %v503, %v487
    %v696 = vpack.c.b16 %v504, %v488
    %v697 = vpack.c.b16 %v521, %v505
    %v698 = vpack.c.b16 %v522, %v506
    %v699 = vpack.c.b16 %v523, %v507
    %v700 = vpack.c.b16 %v524, %v508
    %v701 = vpack.c.b16 %v525, %v509
    %v702 = vpack.c.b16 %v526, %v510
    %v703 = vpack.c.b16 %v527, %v511
    %v704 = vpack.c.b16 %v528, %v512
    %v705 = vpack.c.b16 %v529, %v513
    %v706 = vpack.c.b16 %v530, %v514
    %v707 = vpack.c.b16 %v531, %v515
    %v708 = vpack.c.b16 %v532, %v516
    %v709 = vpack.c.b16 %v533, %v517
    %v710 = vpack.c.b16 %v534, %v518
    %v711 = vpack.c.b16 %v535, %v519
    %v712 = vpack.c.b16 %v536, %v520
    %v713 = vpack.c.b16 %v553, %v537
    %v714 = vpack.c.b16 %v554, %v538
    %v715 = vpack.c.b16 %v555, %v539
    %v716 = vpack.c.b16 %v556, %v540
    %v717 = vpack.c.b16 %v557, %v541
    %v718 = vpack.c.b16 %v558, %v542
    %v719 = vpack.c.b16 %v559, %v543
    %v720 = vpack.c.b16 %v560, %v544
    %v721 = vpack.c.b16 %v561, %v545
    %v722 = vpack.c.b16 %v562, %v546
    %v723 = vpack.c.b16 %v563, %v547
    %v724 = vpack.c.b16 %v564, %v548
    %v725 = vpack.c.b16 %v565, %v549
    %v726 = vpack.c.b16 %v566, %v550
    %v727 = vpack.c.b16 %v567, %v551
    %v728 = vpack.c.b16 %v568, %v552
    %v729 = vpack.c.b16 %v585, %v569
    %v730 = vpack.c.b16 %v586, %v570
    %v731 = vpack.c.b16 %v587, %v571
    %v732 = vpack.c.b16 %v588, %v572
    %v733 = vpack.c.b16 %v589, %v573
    %v734 = vpack.c.b16 %v590, %v574
    %v735 = vpack.c.b16 %v591, %v575
    %v736 = vpack.c.b16 %v592, %v576
    %v737 = vpack.c.b16 %v593, %v577
    %v738 = vpack.c.b16 %v594, %v578
    %v739 = vpack.c.b16 %v595, %v579
    %v740 = vpack.c.b16 %v596, %v580
    %v741 = vpack.c.b16 %v597, %v581
    %v742 = vpack.c.b16 %v598, %v582
    %v743 = vpack.c.b16 %v599, %v583
    %v744 = vpack.c.b16 %v600, %v584
    %v745 = vpack.c.b16 %v617, %v601
    %v746 = vpack.c.b16 %v618, %v602
    %v747 = vpack.c.b16 %v619, %v603
    %v748 = vpack.c.b16 %v620, %v604
    %v749 = vpack.c.b16 %v621, %v605
    %v750 = vpack.c.b16 %v622, %v606
    %v751 = vpack.c.b16 %v623, %v607
    %v752 = vpack.c.b16 %v624, %v608
    %v753 = vpack.c.b16 %v625, %v609
    %v754 = vpack.c.b16 %v626, %v610
    %v755 = vpack.c.b16 %v627, %v611
    %v756 = vpack.c.b16 %v628, %v612
    %v757 = vpack.c.b16 %v629, %v613
    %v758 = vpack.c.b16 %v630, %v614
    %v759 = vpack.c.b16 %v631, %v615
    %v760 = vpack.c.b16 %v632, %v616
    %889 = vmatpush.bf16.msra.mxu0 %v745
    %890 = vmatpush.bf16.msra.mxu0 %v729
    %891 = vmatpush.bf16.msra.mxu0 %v713
    %892 = vmatpush.bf16.msra.mxu0 %v697
    %893 = vmatpush.bf16.msra.mxu0 %v681
    %894 = vmatpush.bf16.msra.mxu0 %v665
    %895 = vmatpush.bf16.msra.mxu0 %v649
    %896 = vmatpush.bf16.msra.mxu0 %v633
    %897 = vmatmul.bf16.gmra.mxu0 %v84
    %v898 = vpop.f32.mrf.mxu0
    %v899 = vadd.f32 %v217, %v898
    %v900 = vpop.f32.mrf.mxu0
    %v901 = vadd.f32 %v217, %v900
    %902 = vdwg.mxu0
    %903 = vmatpush.bf16.msra.mxu0 %v746
    %904 = vmatpush.bf16.msra.mxu0 %v730
    %905 = vmatpush.bf16.msra.mxu0 %v714
    %906 = vmatpush.bf16.msra.mxu0 %v698
    %907 = vmatpush.bf16.msra.mxu0 %v682
    %908 = vmatpush.bf16.msra.mxu0 %v666
    %909 = vmatpush.bf16.msra.mxu0 %v650
    %910 = vmatpush.bf16.msra.mxu0 %v634
    %911 = vmatmul.bf16.gmra.mxu0 %v84
    %v912 = vpop.f32.mrf.mxu0
    %v913 = vadd.f32 %v218, %v912
    %v914 = vpop.f32.mrf.mxu0
    %v915 = vadd.f32 %v218, %v914
    %916 = vdwg.mxu0
    %917 = vmatpush.bf16.msra.mxu0 %v747
    %918 = vmatpush.bf16.msra.mxu0 %v731
    %919 = vmatpush.bf16.msra.mxu0 %v715
    %920 = vmatpush.bf16.msra.mxu0 %v699
    %921 = vmatpush.bf16.msra.mxu0 %v683
    %922 = vmatpush.bf16.msra.mxu0 %v667
    %923 = vmatpush.bf16.msra.mxu0 %v651
    %924 = vmatpush.bf16.msra.mxu0 %v635
    %925 = vmatmul.bf16.gmra.mxu0 %v84
    %v926 = vpop.f32.mrf.mxu0
    %v927 = vadd.f32 %v219, %v926
    %v928 = vpop.f32.mrf.mxu0
    %v929 = vadd.f32 %v219, %v928
    %930 = vdwg.mxu0
    %931 = vmatpush.bf16.msra.mxu0 %v748
    %932 = vmatpush.bf16.msra.mxu0 %v732
    %933 = vmatpush.bf16.msra.mxu0 %v716
    %934 = vmatpush.bf16.msra.mxu0 %v700
    %935 = vmatpush.bf16.msra.mxu0 %v684
    %936 = vmatpush.bf16.msra.mxu0 %v668
    %937 = vmatpush.bf16.msra.mxu0 %v652
    %938 = vmatpush.bf16.msra.mxu0 %v636
    %939 = vmatmul.bf16.gmra.mxu0 %v84
    %v940 = vpop.f32.mrf.mxu0
    %v941 = vadd.f32 %v220, %v940
    %v942 = vpop.f32.mrf.mxu0
    %v943 = vadd.f32 %v220, %v942
    %944 = vdwg.mxu0
    %945 = vmatpush.bf16.msra.mxu0 %v749
    %946 = vmatpush.bf16.msra.mxu0 %v733
    %947 = vmatpush.bf16.msra.mxu0 %v717
    %948 = vmatpush.bf16.msra.mxu0 %v701
    %949 = vmatpush.bf16.msra.mxu0 %v685
    %950 = vmatpush.bf16.msra.mxu0 %v669
    %951 = vmatpush.bf16.msra.mxu0 %v653
    %952 = vmatpush.bf16.msra.mxu0 %v637
    %953 = vmatmul.bf16.gmra.mxu0 %v84
    %v954 = vpop.f32.mrf.mxu0
    %v955 = vadd.f32 %v221, %v954
    %v956 = vpop.f32.mrf.mxu0
    %v957 = vadd.f32 %v221, %v956
    %958 = vdwg.mxu0
    %959 = vmatpush.bf16.msra.mxu0 %v750
    %960 = vmatpush.bf16.msra.mxu0 %v734
    %961 = vmatpush.bf16.msra.mxu0 %v718
    %962 = vmatpush.bf16.msra.mxu0 %v702
    %963 = vmatpush.bf16.msra.mxu0 %v686
    %964 = vmatpush.bf16.msra.mxu0 %v670
    %965 = vmatpush.bf16.msra.mxu0 %v654
    %966 = vmatpush.bf16.msra.mxu0 %v638
    %967 = vmatmul.bf16.gmra.mxu0 %v84
    %v968 = vpop.f32.mrf.mxu0
    %v969 = vadd.f32 %v222, %v968
    %v970 = vpop.f32.mrf.mxu0
    %v971 = vadd.f32 %v222, %v970
    %972 = vdwg.mxu0
    %973 = vmatpush.bf16.msra.mxu0 %v751
    %974 = vmatpush.bf16.msra.mxu0 %v735
    %975 = vmatpush.bf16.msra.mxu0 %v719
    %976 = vmatpush.bf16.msra.mxu0 %v703
    %977 = vmatpush.bf16.msra.mxu0 %v687
    %978 = vmatpush.bf16.msra.mxu0 %v671
    %979 = vmatpush.bf16.msra.mxu0 %v655
    %980 = vmatpush.bf16.msra.mxu0 %v639
    %981 = vmatmul.bf16.gmra.mxu0 %v84
    %v982 = vpop.f32.mrf.mxu0
    %v983 = vadd.f32 %v223, %v982
    %v984 = vpop.f32.mrf.mxu0
    %v985 = vadd.f32 %v223, %v984
    %986 = vdwg.mxu0
    %987 = vmatpush.bf16.msra.mxu0 %v752
    %988 = vmatpush.bf16.msra.mxu0 %v736
    %989 = vmatpush.bf16.msra.mxu0 %v720
    %990 = vmatpush.bf16.msra.mxu0 %v704
    %991 = vmatpush.bf16.msra.mxu0 %v688
    %992 = vmatpush.bf16.msra.mxu0 %v672
    %993 = vmatpush.bf16.msra.mxu0 %v656
    %994 = vmatpush.bf16.msra.mxu0 %v640
    %995 = vmatmul.bf16.gmra.mxu0 %v84
    %v996 = vpop.f32.mrf.mxu0
    %v997 = vadd.f32 %v224, %v996
    %v998 = vpop.f32.mrf.mxu0
    %v999 = vadd.f32 %v224, %v998
    %1000 = vdwg.mxu0
    %1001 = vmatpush.bf16.msra.mxu0 %v753
    %1002 = vmatpush.bf16.msra.mxu0 %v737
    %1003 = vmatpush.bf16.msra.mxu0 %v721
    %1004 = vmatpush.bf16.msra.mxu0 %v705
    %1005 = vmatpush.bf16.msra.mxu0 %v689
    %1006 = vmatpush.bf16.msra.mxu0 %v673
    %1007 = vmatpush.bf16.msra.mxu0 %v657
    %1008 = vmatpush.bf16.msra.mxu0 %v641
    %1009 = vmatmul.bf16.gmra.mxu0 %v84
    %v1010 = vpop.f32.mrf.mxu0
    %v1011 = vadd.f32 %v225, %v1010
    %v1012 = vpop.f32.mrf.mxu0
    %v1013 = vadd.f32 %v225, %v1012
    %1014 = vdwg.mxu0
    %1015 = vmatpush.bf16.msra.mxu0 %v754
    %1016 = vmatpush.bf16.msra.mxu0 %v738
    %1017 = vmatpush.bf16.msra.mxu0 %v722
    %1018 = vmatpush.bf16.msra.mxu0 %v706
    %1019 = vmatpush.bf16.msra.mxu0 %v690
    %1020 = vmatpush.bf16.msra.mxu0 %v674
    %1021 = vmatpush.bf16.msra.mxu0 %v658
    %1022 = vmatpush.bf16.msra.mxu0 %v642
    %1023 = vmatmul.bf16.gmra.mxu0 %v84
    %v1024 = vpop.f32.mrf.mxu0
    %v1025 = vadd.f32 %v226, %v1024
    %v1026 = vpop.f32.mrf.mxu0
    %v1027 = vadd.f32 %v226, %v1026
    %1028 = vdwg.mxu0
    %1029 = vmatpush.bf16.msra.mxu0 %v755
    %1030 = vmatpush.bf16.msra.mxu0 %v739
    %1031 = vmatpush.bf16.msra.mxu0 %v723
    %1032 = vmatpush.bf16.msra.mxu0 %v707
    %1033 = vmatpush.bf16.msra.mxu0 %v691
    %1034 = vmatpush.bf16.msra.mxu0 %v675
    %1035 = vmatpush.bf16.msra.mxu0 %v659
    %1036 = vmatpush.bf16.msra.mxu0 %v643
    %1037 = vmatmul.bf16.gmra.mxu0 %v84
    %v1038 = vpop.f32.mrf.mxu0
    %v1039 = vadd.f32 %v227, %v1038
    %v1040 = vpop.f32.mrf.mxu0
    %v1041 = vadd.f32 %v227, %v1040
    %1042 = vdwg.mxu0
    %1043 = vmatpush.bf16.msra.mxu0 %v756
    %1044 = vmatpush.bf16.msra.mxu0 %v740
    %1045 = vmatpush.bf16.msra.mxu0 %v724
    %1046 = vmatpush.bf16.msra.mxu0 %v708
    %1047 = vmatpush.bf16.msra.mxu0 %v692
    %1048 = vmatpush.bf16.msra.mxu0 %v676
    %1049 = vmatpush.bf16.msra.mxu0 %v660
    %1050 = vmatpush.bf16.msra.mxu0 %v644
    %1051 = vmatmul.bf16.gmra.mxu0 %v84
    %v1052 = vpop.f32.mrf.mxu0
    %v1053 = vadd.f32 %v228, %v1052
    %v1054 = vpop.f32.mrf.mxu0
    %v1055 = vadd.f32 %v228, %v1054
    %1056 = vdwg.mxu0
    %1057 = vmatpush.bf16.msra.mxu0 %v757
    %1058 = vmatpush.bf16.msra.mxu0 %v741
    %1059 = vmatpush.bf16.msra.mxu0 %v725
    %1060 = vmatpush.bf16.msra.mxu0 %v709
    %1061 = vmatpush.bf16.msra.mxu0 %v693
    %1062 = vmatpush.bf16.msra.mxu0 %v677
    %1063 = vmatpush.bf16.msra.mxu0 %v661
    %1064 = vmatpush.bf16.msra.mxu0 %v645
    %1065 = vmatmul.bf16.gmra.mxu0 %v84
    %v1066 = vpop.f32.mrf.mxu0
    %v1067 = vadd.f32 %v229, %v1066
    %v1068 = vpop.f32.mrf.mxu0
    %v1069 = vadd.f32 %v229, %v1068
    %1070 = vdwg.mxu0
    %1071 = vmatpush.bf16.msra.mxu0 %v758
    %1072 = vmatpush.bf16.msra.mxu0 %v742
    %1073 = vmatpush.bf16.msra.mxu0 %v726
    %1074 = vmatpush.bf16.msra.mxu0 %v710
    %1075 = vmatpush.bf16.msra.mxu0 %v694
    %1076 = vmatpush.bf16.msra.mxu0 %v678
    %1077 = vmatpush.bf16.msra.mxu0 %v662
    %1078 = vmatpush.bf16.msra.mxu0 %v646
    %1079 = vmatmul.bf16.gmra.mxu0 %v84
    %v1080 = vpop.f32.mrf.mxu0
    %v1081 = vadd.f32 %v230, %v1080
    %v1082 = vpop.f32.mrf.mxu0
    %v1083 = vadd.f32 %v230, %v1082
    %1084 = vdwg.mxu0
    %1085 = vmatpush.bf16.msra.mxu0 %v759
    %1086 = vmatpush.bf16.msra.mxu0 %v743
    %1087 = vmatpush.bf16.msra.mxu0 %v727
    %1088 = vmatpush.bf16.msra.mxu0 %v711
    %1089 = vmatpush.bf16.msra.mxu0 %v695
    %1090 = vmatpush.bf16.msra.mxu0 %v679
    %1091 = vmatpush.bf16.msra.mxu0 %v663
    %1092 = vmatpush.bf16.msra.mxu0 %v647
    %1093 = vmatmul.bf16.gmra.mxu0 %v84
    %v1094 = vpop.f32.mrf.mxu0
    %v1095 = vadd.f32 %v231, %v1094
    %v1096 = vpop.f32.mrf.mxu0
    %v1097 = vadd.f32 %v231, %v1096
    %1098 = vdwg.mxu0
    %1099 = vmatpush.bf16.msra.mxu0 %v760
    %1100 = vmatpush.bf16.msra.mxu0 %v744
    %1101 = vmatpush.bf16.msra.mxu0 %v728
    %1102 = vmatpush.bf16.msra.mxu0 %v712
    %1103 = vmatpush.bf16.msra.mxu0 %v696
    %1104 = vmatpush.bf16.msra.mxu0 %v680
    %1105 = vmatpush.bf16.msra.mxu0 %v664
    %1106 = vmatpush.bf16.msra.mxu0 %v648
    %1107 = vmatmul.bf16.gmra.mxu0 %v84
    %v1108 = vpop.f32.mrf.mxu0
    %v1109 = vadd.f32 %v232, %v1108
    %v1110 = vpop.f32.mrf.mxu0
    %v1111 = vadd.f32 %v232, %v1110
    %1112 = vdwg.mxu0
    %v1113 = vmax.f32 %v899, 0.0
    %v1114 = vmax.f32 %v913, 0.0
    %v1115 = vmax.f32 %v927, 0.0
    %v1116 = vmax.f32 %v941, 0.0
    %v1117 = vmax.f32 %v955, 0.0
    %v1118 = vmax.f32 %v969, 0.0
    %v1119 = vmax.f32 %v983, 0.0
    %v1120 = vmax.f32 %v997, 0.0
    %v1121 = vmax.f32 %v1011, 0.0
    %v1122 = vmax.f32 %v1025, 0.0
    %v1123 = vmax.f32 %v1039, 0.0
    %v1124 = vmax.f32 %v1053, 0.0
    %v1125 = vmax.f32 %v1067, 0.0
    %v1126 = vmax.f32 %v1081, 0.0
    %v1127 = vmax.f32 %v1095, 0.0
    %v1128 = vmax.f32 %v1109, 0.0
    %v1129 = vmax.f32 %v901, 0.0
    %v1130 = vmax.f32 %v915, 0.0
    %v1131 = vmax.f32 %v929, 0.0
    %v1132 = vmax.f32 %v943, 0.0
    %v1133 = vmax.f32 %v957, 0.0
    %v1134 = vmax.f32 %v971, 0.0
    %v1135 = vmax.f32 %v985, 0.0
    %v1136 = vmax.f32 %v999, 0.0
    %v1137 = vmax.f32 %v1013, 0.0
    %v1138 = vmax.f32 %v1027, 0.0
    %v1139 = vmax.f32 %v1041, 0.0
    %v1140 = vmax.f32 %v1055, 0.0
    %v1141 = vmax.f32 %v1069, 0.0
    %v1142 = vmax.f32 %v1083, 0.0
    %v1143 = vmax.f32 %v1097, 0.0
    %v1144 = vmax.f32 %v1111, 0.0
    %v1145 = vpack.c.bf16 %v1129, %v1113
    %v1146 = vpack.c.bf16 %v1130, %v1114
    %v1147 = vpack.c.bf16 %v1131, %v1115
    %v1148 = vpack.c.bf16 %v1132, %v1116
    %v1149 = vpack.c.bf16 %v1133, %v1117
    %v1150 = vpack.c.bf16 %v1134, %v1118
    %v1151 = vpack.c.bf16 %v1135, %v1119
    %v1152 = vpack.c.bf16 %v1136, %v1120
    %v1153 = vpack.c.bf16 %v1137, %v1121
    %v1154 = vpack.c.bf16 %v1138, %v1122
    %v1155 = vpack.c.bf16 %v1139, %v1123
    %v1156 = vpack.c.bf16 %v1140, %v1124
    %v1157 = vpack.c.bf16 %v1141, %v1125
    %v1158 = vpack.c.bf16 %v1142, %v1126
    %v1159 = vpack.c.bf16 %v1143, %v1127
    %v1160 = vpack.c.bf16 %v1144, %v1128
    %v1161 = vld [vmem:[#allocation8] sm:$0xf]
    %v1162 = vld [vmem:[#allocation8 + $0x4] sm:$0xf]
    %v1163 = vld [vmem:[#allocation8 + $0x8] sm:$0xf]
    %v1164 = vld [vmem:[#allocation8 + $0xc] sm:$0xf]
    %v1165 = vld [vmem:[#allocation8 + $0x10] sm:$0xf]
    %v1166 = vld [vmem:[#allocation8 + $0x14] sm:$0xf]
    %v1167 = vld [vmem:[#allocation8 + $0x18] sm:$0xf]
    %v1168 = vld [vmem:[#allocation8 + $0x1c] sm:$0xf]
    %v1169 = vld [vmem:[#allocation8 + $0x20] sm:$0xf]
    %v1170 = vld [vmem:[#allocation8 + $0x24] sm:$0xf]
    %v1171 = vld [vmem:[#allocation8 + $0x28] sm:$0xf]
    %v1172 = vld [vmem:[#allocation8 + $0x2c] sm:$0xf]
    %v1173 = vld [vmem:[#allocation8 + $0x30] sm:$0xf]
    %v1174 = vld [vmem:[#allocation8 + $0x34] sm:$0xf]
    %v1175 = vld [vmem:[#allocation8 + $0x38] sm:$0xf]
    %v1176 = vld [vmem:[#allocation8 + $0x3c] sm:$0xf]
    %v1177 = vld [vmem:[#allocation8 + $0x40] sm:$0xf]
    %v1178 = vld [vmem:[#allocation8 + $0x44] sm:$0xf]
    %v1179 = vld [vmem:[#allocation8 + $0x48] sm:$0xf]
    %v1180 = vld [vmem:[#allocation8 + $0x4c] sm:$0xf]
    %v1181 = vld [vmem:[#allocation8 + $0x50] sm:$0xf]
    %v1182 = vld [vmem:[#allocation8 + $0x54] sm:$0xf]
    %v1183 = vld [vmem:[#allocation8 + $0x58] sm:$0xf]
    %v1184 = vld [vmem:[#allocation8 + $0x5c] sm:$0xf]
    %v1185 = vld [vmem:[#allocation8 + $0x60] sm:$0xf]
    %v1186 = vld [vmem:[#allocation8 + $0x64] sm:$0xf]
    %v1187 = vld [vmem:[#allocation8 + $0x68] sm:$0xf]
    %v1188 = vld [vmem:[#allocation8 + $0x6c] sm:$0xf]
    %v1189 = vld [vmem:[#allocation8 + $0x70] sm:$0xf]
    %v1190 = vld [vmem:[#allocation8 + $0x74] sm:$0xf]
    %v1191 = vld [vmem:[#allocation8 + $0x78] sm:$0xf]
    %v1192 = vld [vmem:[#allocation8 + $0x7c] sm:$0xf]
    %v1193 = vld [vmem:[#allocation8 + $0x80] sm:$0xf]
    %v1194 = vld [vmem:[#allocation8 + $0x84] sm:$0xf]
    %v1195 = vld [vmem:[#allocation8 + $0x88] sm:$0xf]
    %v1196 = vld [vmem:[#allocation8 + $0x8c] sm:$0xf]
    %v1197 = vld [vmem:[#allocation8 + $0x90] sm:$0xf]
    %v1198 = vld [vmem:[#allocation8 + $0x94] sm:$0xf]
    %v1199 = vld [vmem:[#allocation8 + $0x98] sm:$0xf]
    %v1200 = vld [vmem:[#allocation8 + $0x9c] sm:$0xf]
    %v1201 = vld [vmem:[#allocation8 + $0xa0] sm:$0xf]
    %v1202 = vld [vmem:[#allocation8 + $0xa4] sm:$0xf]
    %v1203 = vld [vmem:[#allocation8 + $0xa8] sm:$0xf]
    %v1204 = vld [vmem:[#allocation8 + $0xac] sm:$0xf]
    %v1205 = vld [vmem:[#allocation8 + $0xb0] sm:$0xf]
    %v1206 = vld [vmem:[#allocation8 + $0xb4] sm:$0xf]
    %v1207 = vld [vmem:[#allocation8 + $0xb8] sm:$0xf]
    %v1208 = vld [vmem:[#allocation8 + $0xbc] sm:$0xf]
    %v1209 = vld [vmem:[#allocation8 + $0xc0] sm:$0xf]
    %v1210 = vld [vmem:[#allocation8 + $0xc4] sm:$0xf]
    %v1211 = vld [vmem:[#allocation8 + $0xc8] sm:$0xf]
    %v1212 = vld [vmem:[#allocation8 + $0xcc] sm:$0xf]
    %v1213 = vld [vmem:[#allocation8 + $0xd0] sm:$0xf]
    %v1214 = vld [vmem:[#allocation8 + $0xd4] sm:$0xf]
    %v1215 = vld [vmem:[#allocation8 + $0xd8] sm:$0xf]
    %v1216 = vld [vmem:[#allocation8 + $0xdc] sm:$0xf]
    %v1217 = vld [vmem:[#allocation8 + $0xe0] sm:$0xf]
    %v1218 = vld [vmem:[#allocation8 + $0xe4] sm:$0xf]
    %v1219 = vld [vmem:[#allocation8 + $0xe8] sm:$0xf]
    %v1220 = vld [vmem:[#allocation8 + $0xec] sm:$0xf]
    %v1221 = vld [vmem:[#allocation8 + $0xf0] sm:$0xf]
    %v1222 = vld [vmem:[#allocation8 + $0xf4] sm:$0xf]
    %v1223 = vld [vmem:[#allocation8 + $0xf8] sm:$0xf]
    %v1224 = vld [vmem:[#allocation8 + $0xfc] sm:$0xf]
    %v1225 = vld [vmem:[#allocation8 + $0x100] sm:$0xf]
    %v1226 = vld [vmem:[#allocation8 + $0x104] sm:$0xf]
    %v1227 = vld [vmem:[#allocation8 + $0x108] sm:$0xf]
    %v1228 = vld [vmem:[#allocation8 + $0x10c] sm:$0xf]
    %v1229 = vld [vmem:[#allocation8 + $0x110] sm:$0xf]
    %v1230 = vld [vmem:[#allocation8 + $0x114] sm:$0xf]
    %v1231 = vld [vmem:[#allocation8 + $0x118] sm:$0xf]
    %v1232 = vld [vmem:[#allocation8 + $0x11c] sm:$0xf]
    %v1233 = vld [vmem:[#allocation8 + $0x120] sm:$0xf]
    %v1234 = vld [vmem:[#allocation8 + $0x124] sm:$0xf]
    %v1235 = vld [vmem:[#allocation8 + $0x128] sm:$0xf]
    %v1236 = vld [vmem:[#allocation8 + $0x12c] sm:$0xf]
    %v1237 = vld [vmem:[#allocation8 + $0x130] sm:$0xf]
    %v1238 = vld [vmem:[#allocation8 + $0x134] sm:$0xf]
    %v1239 = vld [vmem:[#allocation8 + $0x138] sm:$0xf]
    %v1240 = vld [vmem:[#allocation8 + $0x13c] sm:$0xf]
    %v1241 = vld [vmem:[#allocation8 + $0x140] sm:$0xf]
    %v1242 = vld [vmem:[#allocation8 + $0x144] sm:$0xf]
    %v1243 = vld [vmem:[#allocation8 + $0x148] sm:$0xf]
    %v1244 = vld [vmem:[#allocation8 + $0x14c] sm:$0xf]
    %v1245 = vld [vmem:[#allocation8 + $0x150] sm:$0xf]
    %v1246 = vld [vmem:[#allocation8 + $0x154] sm:$0xf]
    %v1247 = vld [vmem:[#allocation8 + $0x158] sm:$0xf]
    %v1248 = vld [vmem:[#allocation8 + $0x15c] sm:$0xf]
    %v1249 = vld [vmem:[#allocation8 + $0x160] sm:$0xf]
    %v1250 = vld [vmem:[#allocation8 + $0x164] sm:$0xf]
    %v1251 = vld [vmem:[#allocation8 + $0x168] sm:$0xf]
    %v1252 = vld [vmem:[#allocation8 + $0x16c] sm:$0xf]
    %v1253 = vld [vmem:[#allocation8 + $0x170] sm:$0xf]
    %v1254 = vld [vmem:[#allocation8 + $0x174] sm:$0xf]
    %v1255 = vld [vmem:[#allocation8 + $0x178] sm:$0xf]
    %v1256 = vld [vmem:[#allocation8 + $0x17c] sm:$0xf]
    %v1257 = vld [vmem:[#allocation8 + $0x180] sm:$0xf]
    %v1258 = vld [vmem:[#allocation8 + $0x184] sm:$0xf]
    %v1259 = vld [vmem:[#allocation8 + $0x188] sm:$0xf]
    %v1260 = vld [vmem:[#allocation8 + $0x18c] sm:$0xf]
    %v1261 = vld [vmem:[#allocation8 + $0x190] sm:$0xf]
    %v1262 = vld [vmem:[#allocation8 + $0x194] sm:$0xf]
    %v1263 = vld [vmem:[#allocation8 + $0x198] sm:$0xf]
    %v1264 = vld [vmem:[#allocation8 + $0x19c] sm:$0xf]
    %v1265 = vld [vmem:[#allocation8 + $0x1a0] sm:$0xf]
    %v1266 = vld [vmem:[#allocation8 + $0x1a4] sm:$0xf]
    %v1267 = vld [vmem:[#allocation8 + $0x1a8] sm:$0xf]
    %v1268 = vld [vmem:[#allocation8 + $0x1ac] sm:$0xf]
    %v1269 = vld [vmem:[#allocation8 + $0x1b0] sm:$0xf]
    %v1270 = vld [vmem:[#allocation8 + $0x1b4] sm:$0xf]
    %v1271 = vld [vmem:[#allocation8 + $0x1b8] sm:$0xf]
    %v1272 = vld [vmem:[#allocation8 + $0x1bc] sm:$0xf]
    %v1273 = vld [vmem:[#allocation8 + $0x1c0] sm:$0xf]
    %v1274 = vld [vmem:[#allocation8 + $0x1c4] sm:$0xf]
    %v1275 = vld [vmem:[#allocation8 + $0x1c8] sm:$0xf]
    %v1276 = vld [vmem:[#allocation8 + $0x1cc] sm:$0xf]
    %v1277 = vld [vmem:[#allocation8 + $0x1d0] sm:$0xf]
    %v1278 = vld [vmem:[#allocation8 + $0x1d4] sm:$0xf]
    %v1279 = vld [vmem:[#allocation8 + $0x1d8] sm:$0xf]
    %v1280 = vld [vmem:[#allocation8 + $0x1dc] sm:$0xf]
    %v1281 = vld [vmem:[#allocation8 + $0x1e0] sm:$0xf]
    %v1282 = vld [vmem:[#allocation8 + $0x1e4] sm:$0xf]
    %v1283 = vld [vmem:[#allocation8 + $0x1e8] sm:$0xf]
    %v1284 = vld [vmem:[#allocation8 + $0x1ec] sm:$0xf]
    %v1285 = vld [vmem:[#allocation8 + $0x1f0] sm:$0xf]
    %v1286 = vld [vmem:[#allocation8 + $0x1f4] sm:$0xf]
    %v1287 = vld [vmem:[#allocation8 + $0x1f8] sm:$0xf]
    %v1288 = vld [vmem:[#allocation8 + $0x1fc] sm:$0xf]
    %v1289 = vld [vmem:[#allocation8 + $0x200] sm:$0xf]
    %v1290 = vld [vmem:[#allocation8 + $0x204] sm:$0xf]
    %v1291 = vld [vmem:[#allocation8 + $0x208] sm:$0xf]
    %v1292 = vld [vmem:[#allocation8 + $0x20c] sm:$0xf]
    %v1293 = vld [vmem:[#allocation8 + $0x210] sm:$0xf]
    %v1294 = vld [vmem:[#allocation8 + $0x214] sm:$0xf]
    %v1295 = vld [vmem:[#allocation8 + $0x218] sm:$0xf]
    %v1296 = vld [vmem:[#allocation8 + $0x21c] sm:$0xf]
    %v1297 = vld [vmem:[#allocation8 + $0x220] sm:$0xf]
    %v1298 = vld [vmem:[#allocation8 + $0x224] sm:$0xf]
    %v1299 = vld [vmem:[#allocation8 + $0x228] sm:$0xf]
    %v1300 = vld [vmem:[#allocation8 + $0x22c] sm:$0xf]
    %v1301 = vld [vmem:[#allocation8 + $0x230] sm:$0xf]
    %v1302 = vld [vmem:[#allocation8 + $0x234] sm:$0xf]
    %v1303 = vld [vmem:[#allocation8 + $0x238] sm:$0xf]
    %v1304 = vld [vmem:[#allocation8 + $0x23c] sm:$0xf]
    %v1305 = vld [vmem:[#allocation8 + $0x240] sm:$0xf]
    %v1306 = vld [vmem:[#allocation8 + $0x244] sm:$0xf]
    %v1307 = vld [vmem:[#allocation8 + $0x248] sm:$0xf]
    %v1308 = vld [vmem:[#allocation8 + $0x24c] sm:$0xf]
    %v1309 = vld [vmem:[#allocation8 + $0x250] sm:$0xf]
    %v1310 = vld [vmem:[#allocation8 + $0x254] sm:$0xf]
    %v1311 = vld [vmem:[#allocation8 + $0x258] sm:$0xf]
    %v1312 = vld [vmem:[#allocation8 + $0x25c] sm:$0xf]
    %v1313 = vld [vmem:[#allocation8 + $0x260] sm:$0xf]
    %v1314 = vld [vmem:[#allocation8 + $0x264] sm:$0xf]
    %v1315 = vld [vmem:[#allocation8 + $0x268] sm:$0xf]
    %v1316 = vld [vmem:[#allocation8 + $0x26c] sm:$0xf]
    %v1317 = vld [vmem:[#allocation8 + $0x270] sm:$0xf]
    %v1318 = vld [vmem:[#allocation8 + $0x274] sm:$0xf]
    %v1319 = vld [vmem:[#allocation8 + $0x278] sm:$0xf]
    %v1320 = vld [vmem:[#allocation8 + $0x27c] sm:$0xf]
    %v1321 = vld [vmem:[#allocation8 + $0x280] sm:$0xf]
    %v1322 = vld [vmem:[#allocation8 + $0x284] sm:$0xf]
    %v1323 = vld [vmem:[#allocation8 + $0x288] sm:$0xf]
    %v1324 = vld [vmem:[#allocation8 + $0x28c] sm:$0xf]
    %v1325 = vld [vmem:[#allocation8 + $0x290] sm:$0xf]
    %v1326 = vld [vmem:[#allocation8 + $0x294] sm:$0xf]
    %v1327 = vld [vmem:[#allocation8 + $0x298] sm:$0xf]
    %v1328 = vld [vmem:[#allocation8 + $0x29c] sm:$0xf]
    %v1329 = vld [vmem:[#allocation8 + $0x2a0] sm:$0xf]
    %v1330 = vld [vmem:[#allocation8 + $0x2a4] sm:$0xf]
    %v1331 = vld [vmem:[#allocation8 + $0x2a8] sm:$0xf]
    %v1332 = vld [vmem:[#allocation8 + $0x2ac] sm:$0xf]
    %v1333 = vld [vmem:[#allocation8 + $0x2b0] sm:$0xf]
    %v1334 = vld [vmem:[#allocation8 + $0x2b4] sm:$0xf]
    %v1335 = vld [vmem:[#allocation8 + $0x2b8] sm:$0xf]
    %v1336 = vld [vmem:[#allocation8 + $0x2bc] sm:$0xf]
    %v1337 = vld [vmem:[#allocation8 + $0x2c0] sm:$0xf]
    %v1338 = vld [vmem:[#allocation8 + $0x2c4] sm:$0xf]
    %v1339 = vld [vmem:[#allocation8 + $0x2c8] sm:$0xf]
    %v1340 = vld [vmem:[#allocation8 + $0x2cc] sm:$0xf]
    %v1341 = vld [vmem:[#allocation8 + $0x2d0] sm:$0xf]
    %v1342 = vld [vmem:[#allocation8 + $0x2d4] sm:$0xf]
    %v1343 = vld [vmem:[#allocation8 + $0x2d8] sm:$0xf]
    %v1344 = vld [vmem:[#allocation8 + $0x2dc] sm:$0xf]
    %v1345 = vld [vmem:[#allocation8 + $0x2e0] sm:$0xf]
    %v1346 = vld [vmem:[#allocation8 + $0x2e4] sm:$0xf]
    %v1347 = vld [vmem:[#allocation8 + $0x2e8] sm:$0xf]
    %v1348 = vld [vmem:[#allocation8 + $0x2ec] sm:$0xf]
    %v1349 = vld [vmem:[#allocation8 + $0x2f0] sm:$0xf]
    %v1350 = vld [vmem:[#allocation8 + $0x2f4] sm:$0xf]
    %v1351 = vld [vmem:[#allocation8 + $0x2f8] sm:$0xf]
    %v1352 = vld [vmem:[#allocation8 + $0x2fc] sm:$0xf]
    %v1353 = vld [vmem:[#allocation8 + $0x300] sm:$0xf]
    %v1354 = vld [vmem:[#allocation8 + $0x304] sm:$0xf]
    %v1355 = vld [vmem:[#allocation8 + $0x308] sm:$0xf]
    %v1356 = vld [vmem:[#allocation8 + $0x30c] sm:$0xf]
    %v1357 = vld [vmem:[#allocation8 + $0x310] sm:$0xf]
    %v1358 = vld [vmem:[#allocation8 + $0x314] sm:$0xf]
    %v1359 = vld [vmem:[#allocation8 + $0x318] sm:$0xf]
    %v1360 = vld [vmem:[#allocation8 + $0x31c] sm:$0xf]
    %v1361 = vld [vmem:[#allocation8 + $0x320] sm:$0xf]
    %v1362 = vld [vmem:[#allocation8 + $0x324] sm:$0xf]
    %v1363 = vld [vmem:[#allocation8 + $0x328] sm:$0xf]
    %v1364 = vld [vmem:[#allocation8 + $0x32c] sm:$0xf]
    %v1365 = vld [vmem:[#allocation8 + $0x330] sm:$0xf]
    %v1366 = vld [vmem:[#allocation8 + $0x334] sm:$0xf]
    %v1367 = vld [vmem:[#allocation8 + $0x338] sm:$0xf]
    %v1368 = vld [vmem:[#allocation8 + $0x33c] sm:$0xf]
    %v1369 = vld [vmem:[#allocation8 + $0x340] sm:$0xf]
    %v1370 = vld [vmem:[#allocation8 + $0x344] sm:$0xf]
    %v1371 = vld [vmem:[#allocation8 + $0x348] sm:$0xf]
    %v1372 = vld [vmem:[#allocation8 + $0x34c] sm:$0xf]
    %v1373 = vld [vmem:[#allocation8 + $0x350] sm:$0xf]
    %v1374 = vld [vmem:[#allocation8 + $0x354] sm:$0xf]
    %v1375 = vld [vmem:[#allocation8 + $0x358] sm:$0xf]
    %v1376 = vld [vmem:[#allocation8 + $0x35c] sm:$0xf]
    %v1377 = vld [vmem:[#allocation8 + $0x360] sm:$0xf]
    %v1378 = vld [vmem:[#allocation8 + $0x364] sm:$0xf]
    %v1379 = vld [vmem:[#allocation8 + $0x368] sm:$0xf]
    %v1380 = vld [vmem:[#allocation8 + $0x36c] sm:$0xf]
    %v1381 = vld [vmem:[#allocation8 + $0x370] sm:$0xf]
    %v1382 = vld [vmem:[#allocation8 + $0x374] sm:$0xf]
    %v1383 = vld [vmem:[#allocation8 + $0x378] sm:$0xf]
    %v1384 = vld [vmem:[#allocation8 + $0x37c] sm:$0xf]
    %v1385 = vld [vmem:[#allocation8 + $0x380] sm:$0xf]
    %v1386 = vld [vmem:[#allocation8 + $0x384] sm:$0xf]
    %v1387 = vld [vmem:[#allocation8 + $0x388] sm:$0xf]
    %v1388 = vld [vmem:[#allocation8 + $0x38c] sm:$0xf]
    %v1389 = vld [vmem:[#allocation8 + $0x390] sm:$0xf]
    %v1390 = vld [vmem:[#allocation8 + $0x394] sm:$0xf]
    %v1391 = vld [vmem:[#allocation8 + $0x398] sm:$0xf]
    %v1392 = vld [vmem:[#allocation8 + $0x39c] sm:$0xf]
    %v1393 = vld [vmem:[#allocation8 + $0x3a0] sm:$0xf]
    %v1394 = vld [vmem:[#allocation8 + $0x3a4] sm:$0xf]
    %v1395 = vld [vmem:[#allocation8 + $0x3a8] sm:$0xf]
    %v1396 = vld [vmem:[#allocation8 + $0x3ac] sm:$0xf]
    %v1397 = vld [vmem:[#allocation8 + $0x3b0] sm:$0xf]
    %v1398 = vld [vmem:[#allocation8 + $0x3b4] sm:$0xf]
    %v1399 = vld [vmem:[#allocation8 + $0x3b8] sm:$0xf]
    %v1400 = vld [vmem:[#allocation8 + $0x3bc] sm:$0xf]
    %v1401 = vld [vmem:[#allocation8 + $0x3c0] sm:$0xf]
    %v1402 = vld [vmem:[#allocation8 + $0x3c4] sm:$0xf]
    %v1403 = vld [vmem:[#allocation8 + $0x3c8] sm:$0xf]
    %v1404 = vld [vmem:[#allocation8 + $0x3cc] sm:$0xf]
    %v1405 = vld [vmem:[#allocation8 + $0x3d0] sm:$0xf]
    %v1406 = vld [vmem:[#allocation8 + $0x3d4] sm:$0xf]
    %v1407 = vld [vmem:[#allocation8 + $0x3d8] sm:$0xf]
    %v1408 = vld [vmem:[#allocation8 + $0x3dc] sm:$0xf]
    %v1409 = vld [vmem:[#allocation8 + $0x3e0] sm:$0xf]
    %v1410 = vld [vmem:[#allocation8 + $0x3e4] sm:$0xf]
    %v1411 = vld [vmem:[#allocation8 + $0x3e8] sm:$0xf]
    %v1412 = vld [vmem:[#allocation8 + $0x3ec] sm:$0xf]
    %v1413 = vld [vmem:[#allocation8 + $0x3f0] sm:$0xf]
    %v1414 = vld [vmem:[#allocation8 + $0x3f4] sm:$0xf]
    %v1415 = vld [vmem:[#allocation8 + $0x3f8] sm:$0xf]
    %v1416 = vld [vmem:[#allocation8 + $0x3fc] sm:$0xf]
    %v1417 = vld [vmem:[%s4] sm:$0x1]
    %v1419 = vperm.slane %v1417, 0
    %v1677 = vunpack.c.l.b16 %v1161
    %v1678 = vunpack.c.l.b16 %v1162
    %v1679 = vunpack.c.l.b16 %v1163
    %v1680 = vunpack.c.l.b16 %v1164
    %v1681 = vunpack.c.l.b16 %v1165
    %v1682 = vunpack.c.l.b16 %v1166
    %v1683 = vunpack.c.l.b16 %v1167
    %v1684 = vunpack.c.l.b16 %v1168
    %v1685 = vunpack.c.l.b16 %v1169
    %v1686 = vunpack.c.l.b16 %v1170
    %v1687 = vunpack.c.l.b16 %v1171
    %v1688 = vunpack.c.l.b16 %v1172
    %v1689 = vunpack.c.l.b16 %v1173
    %v1690 = vunpack.c.l.b16 %v1174
    %v1691 = vunpack.c.l.b16 %v1175
    %v1692 = vunpack.c.l.b16 %v1176
    %v1693 = vunpack.c.l.b16 %v1177
    %v1694 = vunpack.c.l.b16 %v1178
    %v1695 = vunpack.c.l.b16 %v1179
    %v1696 = vunpack.c.l.b16 %v1180
    %v1697 = vunpack.c.l.b16 %v1181
    %v1698 = vunpack.c.l.b16 %v1182
    %v1699 = vunpack.c.l.b16 %v1183
    %v1700 = vunpack.c.l.b16 %v1184
    %v1701 = vunpack.c.l.b16 %v1185
    %v1702 = vunpack.c.l.b16 %v1186
    %v1703 = vunpack.c.l.b16 %v1187
    %v1704 = vunpack.c.l.b16 %v1188
    %v1705 = vunpack.c.l.b16 %v1189
    %v1706 = vunpack.c.l.b16 %v1190
    %v1707 = vunpack.c.l.b16 %v1191
    %v1708 = vunpack.c.l.b16 %v1192
    %v1709 = vunpack.c.l.b16 %v1193
    %v1710 = vunpack.c.l.b16 %v1194
    %v1711 = vunpack.c.l.b16 %v1195
    %v1712 = vunpack.c.l.b16 %v1196
    %v1713 = vunpack.c.l.b16 %v1197
    %v1714 = vunpack.c.l.b16 %v1198
    %v1715 = vunpack.c.l.b16 %v1199
    %v1716 = vunpack.c.l.b16 %v1200
    %v1717 = vunpack.c.l.b16 %v1201
    %v1718 = vunpack.c.l.b16 %v1202
    %v1719 = vunpack.c.l.b16 %v1203
    %v1720 = vunpack.c.l.b16 %v1204
    %v1721 = vunpack.c.l.b16 %v1205
    %v1722 = vunpack.c.l.b16 %v1206
    %v1723 = vunpack.c.l.b16 %v1207
    %v1724 = vunpack.c.l.b16 %v1208
    %v1725 = vunpack.c.l.b16 %v1209
    %v1726 = vunpack.c.l.b16 %v1210
    %v1727 = vunpack.c.l.b16 %v1211
    %v1728 = vunpack.c.l.b16 %v1212
    %v1729 = vunpack.c.l.b16 %v1213
    %v1730 = vunpack.c.l.b16 %v1214
    %v1731 = vunpack.c.l.b16 %v1215
    %v1732 = vunpack.c.l.b16 %v1216
    %v1733 = vunpack.c.l.b16 %v1217
    %v1734 = vunpack.c.l.b16 %v1218
    %v1735 = vunpack.c.l.b16 %v1219
    %v1736 = vunpack.c.l.b16 %v1220
    %v1737 = vunpack.c.l.b16 %v1221
    %v1738 = vunpack.c.l.b16 %v1222
    %v1739 = vunpack.c.l.b16 %v1223
    %v1740 = vunpack.c.l.b16 %v1224
    %v1741 = vunpack.c.l.b16 %v1225
    %v1742 = vunpack.c.l.b16 %v1226
    %v1743 = vunpack.c.l.b16 %v1227
    %v1744 = vunpack.c.l.b16 %v1228
    %v1745 = vunpack.c.l.b16 %v1229
    %v1746 = vunpack.c.l.b16 %v1230
    %v1747 = vunpack.c.l.b16 %v1231
    %v1748 = vunpack.c.l.b16 %v1232
    %v1749 = vunpack.c.l.b16 %v1233
    %v1750 = vunpack.c.l.b16 %v1234
    %v1751 = vunpack.c.l.b16 %v1235
    %v1752 = vunpack.c.l.b16 %v1236
    %v1753 = vunpack.c.l.b16 %v1237
    %v1754 = vunpack.c.l.b16 %v1238
    %v1755 = vunpack.c.l.b16 %v1239
    %v1756 = vunpack.c.l.b16 %v1240
    %v1757 = vunpack.c.l.b16 %v1241
    %v1758 = vunpack.c.l.b16 %v1242
    %v1759 = vunpack.c.l.b16 %v1243
    %v1760 = vunpack.c.l.b16 %v1244
    %v1761 = vunpack.c.l.b16 %v1245
    %v1762 = vunpack.c.l.b16 %v1246
    %v1763 = vunpack.c.l.b16 %v1247
    %v1764 = vunpack.c.l.b16 %v1248
    %v1765 = vunpack.c.l.b16 %v1249
    %v1766 = vunpack.c.l.b16 %v1250
    %v1767 = vunpack.c.l.b16 %v1251
    %v1768 = vunpack.c.l.b16 %v1252
    %v1769 = vunpack.c.l.b16 %v1253
    %v1770 = vunpack.c.l.b16 %v1254
    %v1771 = vunpack.c.l.b16 %v1255
    %v1772 = vunpack.c.l.b16 %v1256
    %v1773 = vunpack.c.l.b16 %v1257
    %v1774 = vunpack.c.l.b16 %v1258
    %v1775 = vunpack.c.l.b16 %v1259
    %v1776 = vunpack.c.l.b16 %v1260
    %v1777 = vunpack.c.l.b16 %v1261
    %v1778 = vunpack.c.l.b16 %v1262
    %v1779 = vunpack.c.l.b16 %v1263
    %v1780 = vunpack.c.l.b16 %v1264
    %v1781 = vunpack.c.l.b16 %v1265
    %v1782 = vunpack.c.l.b16 %v1266
    %v1783 = vunpack.c.l.b16 %v1267
    %v1784 = vunpack.c.l.b16 %v1268
    %v1785 = vunpack.c.l.b16 %v1269
    %v1786 = vunpack.c.l.b16 %v1270
    %v1787 = vunpack.c.l.b16 %v1271
    %v1788 = vunpack.c.l.b16 %v1272
    %v1789 = vunpack.c.l.b16 %v1273
    %v1790 = vunpack.c.l.b16 %v1274
    %v1791 = vunpack.c.l.b16 %v1275
    %v1792 = vunpack.c.l.b16 %v1276
    %v1793 = vunpack.c.l.b16 %v1277
    %v1794 = vunpack.c.l.b16 %v1278
    %v1795 = vunpack.c.l.b16 %v1279
    %v1796 = vunpack.c.l.b16 %v1280
    %v1797 = vunpack.c.l.b16 %v1281
    %v1798 = vunpack.c.l.b16 %v1282
    %v1799 = vunpack.c.l.b16 %v1283
    %v1800 = vunpack.c.l.b16 %v1284
    %v1801 = vunpack.c.l.b16 %v1285
    %v1802 = vunpack.c.l.b16 %v1286
    %v1803 = vunpack.c.l.b16 %v1287
    %v1804 = vunpack.c.l.b16 %v1288
    %v1805 = vunpack.c.l.b16 %v1289
    %v1806 = vunpack.c.l.b16 %v1290
    %v1807 = vunpack.c.l.b16 %v1291
    %v1808 = vunpack.c.l.b16 %v1292
    %v1809 = vunpack.c.l.b16 %v1293
    %v1810 = vunpack.c.l.b16 %v1294
    %v1811 = vunpack.c.l.b16 %v1295
    %v1812 = vunpack.c.l.b16 %v1296
    %v1813 = vunpack.c.l.b16 %v1297
    %v1814 = vunpack.c.l.b16 %v1298
    %v1815 = vunpack.c.l.b16 %v1299
    %v1816 = vunpack.c.l.b16 %v1300
    %v1817 = vunpack.c.l.b16 %v1301
    %v1818 = vunpack.c.l.b16 %v1302
    %v1819 = vunpack.c.l.b16 %v1303
    %v1820 = vunpack.c.l.b16 %v1304
    %v1821 = vunpack.c.l.b16 %v1305
    %v1822 = vunpack.c.l.b16 %v1306
    %v1823 = vunpack.c.l.b16 %v1307
    %v1824 = vunpack.c.l.b16 %v1308
    %v1825 = vunpack.c.l.b16 %v1309
    %v1826 = vunpack.c.l.b16 %v1310
    %v1827 = vunpack.c.l.b16 %v1311
    %v1828 = vunpack.c.l.b16 %v1312
    %v1829 = vunpack.c.l.b16 %v1313
    %v1830 = vunpack.c.l.b16 %v1314
    %v1831 = vunpack.c.l.b16 %v1315
    %v1832 = vunpack.c.l.b16 %v1316
    %v1833 = vunpack.c.l.b16 %v1317
    %v1834 = vunpack.c.l.b16 %v1318
    %v1835 = vunpack.c.l.b16 %v1319
    %v1836 = vunpack.c.l.b16 %v1320
    %v1837 = vunpack.c.l.b16 %v1321
    %v1838 = vunpack.c.l.b16 %v1322
    %v1839 = vunpack.c.l.b16 %v1323
    %v1840 = vunpack.c.l.b16 %v1324
    %v1841 = vunpack.c.l.b16 %v1325
    %v1842 = vunpack.c.l.b16 %v1326
    %v1843 = vunpack.c.l.b16 %v1327
    %v1844 = vunpack.c.l.b16 %v1328
    %v1845 = vunpack.c.l.b16 %v1329
    %v1846 = vunpack.c.l.b16 %v1330
    %v1847 = vunpack.c.l.b16 %v1331
    %v1848 = vunpack.c.l.b16 %v1332
    %v1849 = vunpack.c.l.b16 %v1333
    %v1850 = vunpack.c.l.b16 %v1334
    %v1851 = vunpack.c.l.b16 %v1335
    %v1852 = vunpack.c.l.b16 %v1336
    %v1853 = vunpack.c.l.b16 %v1337
    %v1854 = vunpack.c.l.b16 %v1338
    %v1855 = vunpack.c.l.b16 %v1339
    %v1856 = vunpack.c.l.b16 %v1340
    %v1857 = vunpack.c.l.b16 %v1341
    %v1858 = vunpack.c.l.b16 %v1342
    %v1859 = vunpack.c.l.b16 %v1343
    %v1860 = vunpack.c.l.b16 %v1344
    %v1861 = vunpack.c.l.b16 %v1345
    %v1862 = vunpack.c.l.b16 %v1346
    %v1863 = vunpack.c.l.b16 %v1347
    %v1864 = vunpack.c.l.b16 %v1348
    %v1865 = vunpack.c.l.b16 %v1349
    %v1866 = vunpack.c.l.b16 %v1350
    %v1867 = vunpack.c.l.b16 %v1351
    %v1868 = vunpack.c.l.b16 %v1352
    %v1869 = vunpack.c.l.b16 %v1353
    %v1870 = vunpack.c.l.b16 %v1354
    %v1871 = vunpack.c.l.b16 %v1355
    %v1872 = vunpack.c.l.b16 %v1356
    %v1873 = vunpack.c.l.b16 %v1357
    %v1874 = vunpack.c.l.b16 %v1358
    %v1875 = vunpack.c.l.b16 %v1359
    %v1876 = vunpack.c.l.b16 %v1360
    %v1877 = vunpack.c.l.b16 %v1361
    %v1878 = vunpack.c.l.b16 %v1362
    %v1879 = vunpack.c.l.b16 %v1363
    %v1880 = vunpack.c.l.b16 %v1364
    %v1881 = vunpack.c.l.b16 %v1365
    %v1882 = vunpack.c.l.b16 %v1366
    %v1883 = vunpack.c.l.b16 %v1367
    %v1884 = vunpack.c.l.b16 %v1368
    %v1885 = vunpack.c.l.b16 %v1369
    %v1886 = vunpack.c.l.b16 %v1370
    %v1887 = vunpack.c.l.b16 %v1371
    %v1888 = vunpack.c.l.b16 %v1372
    %v1889 = vunpack.c.l.b16 %v1373
    %v1890 = vunpack.c.l.b16 %v1374
    %v1891 = vunpack.c.l.b16 %v1375
    %v1892 = vunpack.c.l.b16 %v1376
    %v1893 = vunpack.c.l.b16 %v1377
    %v1894 = vunpack.c.l.b16 %v1378
    %v1895 = vunpack.c.l.b16 %v1379
    %v1896 = vunpack.c.l.b16 %v1380
    %v1897 = vunpack.c.l.b16 %v1381
    %v1898 = vunpack.c.l.b16 %v1382
    %v1899 = vunpack.c.l.b16 %v1383
    %v1900 = vunpack.c.l.b16 %v1384
    %v1901 = vunpack.c.l.b16 %v1385
    %v1902 = vunpack.c.l.b16 %v1386
    %v1903 = vunpack.c.l.b16 %v1387
    %v1904 = vunpack.c.l.b16 %v1388
    %v1905 = vunpack.c.l.b16 %v1389
    %v1906 = vunpack.c.l.b16 %v1390
    %v1907 = vunpack.c.l.b16 %v1391
    %v1908 = vunpack.c.l.b16 %v1392
    %v1909 = vunpack.c.l.b16 %v1393
    %v1910 = vunpack.c.l.b16 %v1394
    %v1911 = vunpack.c.l.b16 %v1395
    %v1912 = vunpack.c.l.b16 %v1396
    %v1913 = vunpack.c.l.b16 %v1397
    %v1914 = vunpack.c.l.b16 %v1398
    %v1915 = vunpack.c.l.b16 %v1399
    %v1916 = vunpack.c.l.b16 %v1400
    %v1917 = vunpack.c.l.b16 %v1401
    %v1918 = vunpack.c.l.b16 %v1402
    %v1919 = vunpack.c.l.b16 %v1403
    %v1920 = vunpack.c.l.b16 %v1404
    %v1921 = vunpack.c.l.b16 %v1405
    %v1922 = vunpack.c.l.b16 %v1406
    %v1923 = vunpack.c.l.b16 %v1407
    %v1924 = vunpack.c.l.b16 %v1408
    %v1925 = vunpack.c.l.b16 %v1409
    %v1926 = vunpack.c.l.b16 %v1410
    %v1927 = vunpack.c.l.b16 %v1411
    %v1928 = vunpack.c.l.b16 %v1412
    %v1929 = vunpack.c.l.b16 %v1413
    %v1930 = vunpack.c.l.b16 %v1414
    %v1931 = vunpack.c.l.b16 %v1415
    %v1932 = vunpack.c.l.b16 %v1416
    %v1933 = vpack.c.b16 %v1678, %v1677
    %v1934 = vpack.c.b16 %v1680, %v1679
    %v1935 = vpack.c.b16 %v1682, %v1681
    %v1936 = vpack.c.b16 %v1684, %v1683
    %v1937 = vpack.c.b16 %v1686, %v1685
    %v1938 = vpack.c.b16 %v1688, %v1687
    %v1939 = vpack.c.b16 %v1690, %v1689
    %v1940 = vpack.c.b16 %v1692, %v1691
    %v1941 = vpack.c.b16 %v1694, %v1693
    %v1942 = vpack.c.b16 %v1696, %v1695
    %v1943 = vpack.c.b16 %v1698, %v1697
    %v1944 = vpack.c.b16 %v1700, %v1699
    %v1945 = vpack.c.b16 %v1702, %v1701
    %v1946 = vpack.c.b16 %v1704, %v1703
    %v1947 = vpack.c.b16 %v1706, %v1705
    %v1948 = vpack.c.b16 %v1708, %v1707
    %v1949 = vpack.c.b16 %v1710, %v1709
    %v1950 = vpack.c.b16 %v1712, %v1711
    %v1951 = vpack.c.b16 %v1714, %v1713
    %v1952 = vpack.c.b16 %v1716, %v1715
    %v1953 = vpack.c.b16 %v1718, %v1717
    %v1954 = vpack.c.b16 %v1720, %v1719
    %v1955 = vpack.c.b16 %v1722, %v1721
    %v1956 = vpack.c.b16 %v1724, %v1723
    %v1957 = vpack.c.b16 %v1726, %v1725
    %v1958 = vpack.c.b16 %v1728, %v1727
    %v1959 = vpack.c.b16 %v1730, %v1729
    %v1960 = vpack.c.b16 %v1732, %v1731
    %v1961 = vpack.c.b16 %v1734, %v1733
    %v1962 = vpack.c.b16 %v1736, %v1735
    %v1963 = vpack.c.b16 %v1738, %v1737
    %v1964 = vpack.c.b16 %v1740, %v1739
    %v1965 = vpack.c.b16 %v1742, %v1741
    %v1966 = vpack.c.b16 %v1744, %v1743
    %v1967 = vpack.c.b16 %v1746, %v1745
    %v1968 = vpack.c.b16 %v1748, %v1747
    %v1969 = vpack.c.b16 %v1750, %v1749
    %v1970 = vpack.c.b16 %v1752, %v1751
    %v1971 = vpack.c.b16 %v1754, %v1753
    %v1972 = vpack.c.b16 %v1756, %v1755
    %v1973 = vpack.c.b16 %v1758, %v1757
    %v1974 = vpack.c.b16 %v1760, %v1759
    %v1975 = vpack.c.b16 %v1762, %v1761
    %v1976 = vpack.c.b16 %v1764, %v1763
    %v1977 = vpack.c.b16 %v1766, %v1765
    %v1978 = vpack.c.b16 %v1768, %v1767
    %v1979 = vpack.c.b16 %v1770, %v1769
    %v1980 = vpack.c.b16 %v1772, %v1771
    %v1981 = vpack.c.b16 %v1774, %v1773
    %v1982 = vpack.c.b16 %v1776, %v1775
    %v1983 = vpack.c.b16 %v1778, %v1777
    %v1984 = vpack.c.b16 %v1780, %v1779
    %v1985 = vpack.c.b16 %v1782, %v1781
    %v1986 = vpack.c.b16 %v1784, %v1783
    %v1987 = vpack.c.b16 %v1786, %v1785
    %v1988 = vpack.c.b16 %v1788, %v1787
    %v1989 = vpack.c.b16 %v1790, %v1789
    %v1990 = vpack.c.b16 %v1792, %v1791
    %v1991 = vpack.c.b16 %v1794, %v1793
    %v1992 = vpack.c.b16 %v1796, %v1795
    %v1993 = vpack.c.b16 %v1798, %v1797
    %v1994 = vpack.c.b16 %v1800, %v1799
    %v1995 = vpack.c.b16 %v1802, %v1801
    %v1996 = vpack.c.b16 %v1804, %v1803
    %v1997 = vpack.c.b16 %v1806, %v1805
    %v1998 = vpack.c.b16 %v1808, %v1807
    %v1999 = vpack.c.b16 %v1810, %v1809
    %v2000 = vpack.c.b16 %v1812, %v1811
    %v2001 = vpack.c.b16 %v1814, %v1813
    %v2002 = vpack.c.b16 %v1816, %v1815
    %v2003 = vpack.c.b16 %v1818, %v1817
    %v2004 = vpack.c.b16 %v1820, %v1819
    %v2005 = vpack.c.b16 %v1822, %v1821
    %v2006 = vpack.c.b16 %v1824, %v1823
    %v2007 = vpack.c.b16 %v1826, %v1825
    %v2008 = vpack.c.b16 %v1828, %v1827
    %v2009 = vpack.c.b16 %v1830, %v1829
    %v2010 = vpack.c.b16 %v1832, %v1831
    %v2011 = vpack.c.b16 %v1834, %v1833
    %v2012 = vpack.c.b16 %v1836, %v1835
    %v2013 = vpack.c.b16 %v1838, %v1837
    %v2014 = vpack.c.b16 %v1840, %v1839
    %v2015 = vpack.c.b16 %v1842, %v1841
    %v2016 = vpack.c.b16 %v1844, %v1843
    %v2017 = vpack.c.b16 %v1846, %v1845
    %v2018 = vpack.c.b16 %v1848, %v1847
    %v2019 = vpack.c.b16 %v1850, %v1849
    %v2020 = vpack.c.b16 %v1852, %v1851
    %v2021 = vpack.c.b16 %v1854, %v1853
    %v2022 = vpack.c.b16 %v1856, %v1855
    %v2023 = vpack.c.b16 %v1858, %v1857
    %v2024 = vpack.c.b16 %v1860, %v1859
    %v2025 = vpack.c.b16 %v1862, %v1861
    %v2026 = vpack.c.b16 %v1864, %v1863
    %v2027 = vpack.c.b16 %v1866, %v1865
    %v2028 = vpack.c.b16 %v1868, %v1867
    %v2029 = vpack.c.b16 %v1870, %v1869
    %v2030 = vpack.c.b16 %v1872, %v1871
    %v2031 = vpack.c.b16 %v1874, %v1873
    %v2032 = vpack.c.b16 %v1876, %v1875
    %v2033 = vpack.c.b16 %v1878, %v1877
    %v2034 = vpack.c.b16 %v1880, %v1879
    %v2035 = vpack.c.b16 %v1882, %v1881
    %v2036 = vpack.c.b16 %v1884, %v1883
    %v2037 = vpack.c.b16 %v1886, %v1885
    %v2038 = vpack.c.b16 %v1888, %v1887
    %v2039 = vpack.c.b16 %v1890, %v1889
    %v2040 = vpack.c.b16 %v1892, %v1891
    %v2041 = vpack.c.b16 %v1894, %v1893
    %v2042 = vpack.c.b16 %v1896, %v1895
    %v2043 = vpack.c.b16 %v1898, %v1897
    %v2044 = vpack.c.b16 %v1900, %v1899
    %v2045 = vpack.c.b16 %v1902, %v1901
    %v2046 = vpack.c.b16 %v1904, %v1903
    %v2047 = vpack.c.b16 %v1906, %v1905
    %v2048 = vpack.c.b16 %v1908, %v1907
    %v2049 = vpack.c.b16 %v1910, %v1909
    %v2050 = vpack.c.b16 %v1912, %v1911
    %v2051 = vpack.c.b16 %v1914, %v1913
    %v2052 = vpack.c.b16 %v1916, %v1915
    %v2053 = vpack.c.b16 %v1918, %v1917
    %v2054 = vpack.c.b16 %v1920, %v1919
    %v2055 = vpack.c.b16 %v1922, %v1921
    %v2056 = vpack.c.b16 %v1924, %v1923
    %v2057 = vpack.c.b16 %v1926, %v1925
    %v2058 = vpack.c.b16 %v1928, %v1927
    %v2059 = vpack.c.b16 %v1930, %v1929
    %v2060 = vpack.c.b16 %v1932, %v1931
    %2189 = vmatpush.bf16.msra.mxu0 %v1940
    %2190 = vmatpush.bf16.msra.mxu0 %v1939
    %2191 = vmatpush.bf16.msra.mxu0 %v1938
    %2192 = vmatpush.bf16.msra.mxu0 %v1937
    %2193 = vmatpush.bf16.msra.mxu0 %v1936
    %2194 = vmatpush.bf16.msra.mxu0 %v1935
    %2195 = vmatpush.bf16.msra.mxu0 %v1934
    %2196 = vmatpush.bf16.msra.mxu0 %v1933
    %2197 = vmatmul.bf16.gmra.mxu0 %v1145
    %v2198 = vpop.f32.mrf.mxu0
    %v2199 = vadd.f32 %v1419, %v2198
    %v2200 = vpop.f32.mrf.mxu0
    %v2201 = vadd.f32 %v1419, %v2200
    %2202 = vdwg.mxu0
    %2203 = vmatpush.bf16.msra.mxu0 %v1948
    %2204 = vmatpush.bf16.msra.mxu0 %v1947
    %2205 = vmatpush.bf16.msra.mxu0 %v1946
    %2206 = vmatpush.bf16.msra.mxu0 %v1945
    %2207 = vmatpush.bf16.msra.mxu0 %v1944
    %2208 = vmatpush.bf16.msra.mxu0 %v1943
    %2209 = vmatpush.bf16.msra.mxu0 %v1942
    %2210 = vmatpush.bf16.msra.mxu0 %v1941
    %2211 = vmatmul.bf16.gmra.mxu0 %v1146
    %v2212 = vpop.f32.mrf.mxu0
    %v2213 = vadd.f32 %v2199, %v2212
    %v2214 = vpop.f32.mrf.mxu0
    %v2215 = vadd.f32 %v2201, %v2214
    %2216 = vdwg.mxu0
    %2217 = vmatpush.bf16.msra.mxu0 %v1956
    %2218 = vmatpush.bf16.msra.mxu0 %v1955
    %2219 = vmatpush.bf16.msra.mxu0 %v1954
    %2220 = vmatpush.bf16.msra.mxu0 %v1953
    %2221 = vmatpush.bf16.msra.mxu0 %v1952
    %2222 = vmatpush.bf16.msra.mxu0 %v1951
    %2223 = vmatpush.bf16.msra.mxu0 %v1950
    %2224 = vmatpush.bf16.msra.mxu0 %v1949
    %2225 = vmatmul.bf16.gmra.mxu0 %v1147
    %v2226 = vpop.f32.mrf.mxu0
    %v2227 = vadd.f32 %v2213, %v2226
    %v2228 = vpop.f32.mrf.mxu0
    %v2229 = vadd.f32 %v2215, %v2228
    %2230 = vdwg.mxu0
    %2231 = vmatpush.bf16.msra.mxu0 %v1964
    %2232 = vmatpush.bf16.msra.mxu0 %v1963
    %2233 = vmatpush.bf16.msra.mxu0 %v1962
    %2234 = vmatpush.bf16.msra.mxu0 %v1961
    %2235 = vmatpush.bf16.msra.mxu0 %v1960
    %2236 = vmatpush.bf16.msra.mxu0 %v1959
    %2237 = vmatpush.bf16.msra.mxu0 %v1958
    %2238 = vmatpush.bf16.msra.mxu0 %v1957
    %2239 = vmatmul.bf16.gmra.mxu0 %v1148
    %v2240 = vpop.f32.mrf.mxu0
    %v2241 = vadd.f32 %v2227, %v2240
    %v2242 = vpop.f32.mrf.mxu0
    %v2243 = vadd.f32 %v2229, %v2242
    %2244 = vdwg.mxu0
    %2245 = vmatpush.bf16.msra.mxu0 %v1972
    %2246 = vmatpush.bf16.msra.mxu0 %v1971
    %2247 = vmatpush.bf16.msra.mxu0 %v1970
    %2248 = vmatpush.bf16.msra.mxu0 %v1969
    %2249 = vmatpush.bf16.msra.mxu0 %v1968
    %2250 = vmatpush.bf16.msra.mxu0 %v1967
    %2251 = vmatpush.bf16.msra.mxu0 %v1966
    %2252 = vmatpush.bf16.msra.mxu0 %v1965
    %2253 = vmatmul.bf16.gmra.mxu0 %v1149
    %v2254 = vpop.f32.mrf.mxu0
    %v2255 = vadd.f32 %v2241, %v2254
    %v2256 = vpop.f32.mrf.mxu0
    %v2257 = vadd.f32 %v2243, %v2256
    %2258 = vdwg.mxu0
    %2259 = vmatpush.bf16.msra.mxu0 %v1980
    %2260 = vmatpush.bf16.msra.mxu0 %v1979
    %2261 = vmatpush.bf16.msra.mxu0 %v1978
    %2262 = vmatpush.bf16.msra.mxu0 %v1977
    %2263 = vmatpush.bf16.msra.mxu0 %v1976
    %2264 = vmatpush.bf16.msra.mxu0 %v1975
    %2265 = vmatpush.bf16.msra.mxu0 %v1974
    %2266 = vmatpush.bf16.msra.mxu0 %v1973
    %2267 = vmatmul.bf16.gmra.mxu0 %v1150
    %v2268 = vpop.f32.mrf.mxu0
    %v2269 = vadd.f32 %v2255, %v2268
    %v2270 = vpop.f32.mrf.mxu0
    %v2271 = vadd.f32 %v2257, %v2270
    %2272 = vdwg.mxu0
    %2273 = vmatpush.bf16.msra.mxu0 %v1988
    %2274 = vmatpush.bf16.msra.mxu0 %v1987
    %2275 = vmatpush.bf16.msra.mxu0 %v1986
    %2276 = vmatpush.bf16.msra.mxu0 %v1985
    %2277 = vmatpush.bf16.msra.mxu0 %v1984
    %2278 = vmatpush.bf16.msra.mxu0 %v1983
    %2279 = vmatpush.bf16.msra.mxu0 %v1982
    %2280 = vmatpush.bf16.msra.mxu0 %v1981
    %2281 = vmatmul.bf16.gmra.mxu0 %v1151
    %v2282 = vpop.f32.mrf.mxu0
    %v2283 = vadd.f32 %v2269, %v2282
    %v2284 = vpop.f32.mrf.mxu0
    %v2285 = vadd.f32 %v2271, %v2284
    %2286 = vdwg.mxu0
    %2287 = vmatpush.bf16.msra.mxu0 %v1996
    %2288 = vmatpush.bf16.msra.mxu0 %v1995
    %2289 = vmatpush.bf16.msra.mxu0 %v1994
    %2290 = vmatpush.bf16.msra.mxu0 %v1993
    %2291 = vmatpush.bf16.msra.mxu0 %v1992
    %2292 = vmatpush.bf16.msra.mxu0 %v1991
    %2293 = vmatpush.bf16.msra.mxu0 %v1990
    %2294 = vmatpush.bf16.msra.mxu0 %v1989
    %2295 = vmatmul.bf16.gmra.mxu0 %v1152
    %v2296 = vpop.f32.mrf.mxu0
    %v2297 = vadd.f32 %v2283, %v2296
    %v2298 = vpop.f32.mrf.mxu0
    %v2299 = vadd.f32 %v2285, %v2298
    %2300 = vdwg.mxu0
    %2301 = vmatpush.bf16.msra.mxu0 %v2004
    %2302 = vmatpush.bf16.msra.mxu0 %v2003
    %2303 = vmatpush.bf16.msra.mxu0 %v2002
    %2304 = vmatpush.bf16.msra.mxu0 %v2001
    %2305 = vmatpush.bf16.msra.mxu0 %v2000
    %2306 = vmatpush.bf16.msra.mxu0 %v1999
    %2307 = vmatpush.bf16.msra.mxu0 %v1998
    %2308 = vmatpush.bf16.msra.mxu0 %v1997
    %2309 = vmatmul.bf16.gmra.mxu0 %v1153
    %v2310 = vpop.f32.mrf.mxu0
    %v2311 = vadd.f32 %v2297, %v2310
    %v2312 = vpop.f32.mrf.mxu0
    %v2313 = vadd.f32 %v2299, %v2312
    %2314 = vdwg.mxu0
    %2315 = vmatpush.bf16.msra.mxu0 %v2012
    %2316 = vmatpush.bf16.msra.mxu0 %v2011
    %2317 = vmatpush.bf16.msra.mxu0 %v2010
    %2318 = vmatpush.bf16.msra.mxu0 %v2009
    %2319 = vmatpush.bf16.msra.mxu0 %v2008
    %2320 = vmatpush.bf16.msra.mxu0 %v2007
    %2321 = vmatpush.bf16.msra.mxu0 %v2006
    %2322 = vmatpush.bf16.msra.mxu0 %v2005
    %2323 = vmatmul.bf16.gmra.mxu0 %v1154
    %v2324 = vpop.f32.mrf.mxu0
    %v2325 = vadd.f32 %v2311, %v2324
    %v2326 = vpop.f32.mrf.mxu0
    %v2327 = vadd.f32 %v2313, %v2326
    %2328 = vdwg.mxu0
    %2329 = vmatpush.bf16.msra.mxu0 %v2020
    %2330 = vmatpush.bf16.msra.mxu0 %v2019
    %2331 = vmatpush.bf16.msra.mxu0 %v2018
    %2332 = vmatpush.bf16.msra.mxu0 %v2017
    %2333 = vmatpush.bf16.msra.mxu0 %v2016
    %2334 = vmatpush.bf16.msra.mxu0 %v2015
    %2335 = vmatpush.bf16.msra.mxu0 %v2014
    %2336 = vmatpush.bf16.msra.mxu0 %v2013
    %2337 = vmatmul.bf16.gmra.mxu0 %v1155
    %v2338 = vpop.f32.mrf.mxu0
    %v2339 = vadd.f32 %v2325, %v2338
    %v2340 = vpop.f32.mrf.mxu0
    %v2341 = vadd.f32 %v2327, %v2340
    %2342 = vdwg.mxu0
    %2343 = vmatpush.bf16.msra.mxu0 %v2028
    %2344 = vmatpush.bf16.msra.mxu0 %v2027
    %2345 = vmatpush.bf16.msra.mxu0 %v2026
    %2346 = vmatpush.bf16.msra.mxu0 %v2025
    %2347 = vmatpush.bf16.msra.mxu0 %v2024
    %2348 = vmatpush.bf16.msra.mxu0 %v2023
    %2349 = vmatpush.bf16.msra.mxu0 %v2022
    %2350 = vmatpush.bf16.msra.mxu0 %v2021
    %2351 = vmatmul.bf16.gmra.mxu0 %v1156
    %v2352 = vpop.f32.mrf.mxu0
    %v2353 = vadd.f32 %v2339, %v2352
    %v2354 = vpop.f32.mrf.mxu0
    %v2355 = vadd.f32 %v2341, %v2354
    %2356 = vdwg.mxu0
    %2357 = vmatpush.bf16.msra.mxu0 %v2036
    %2358 = vmatpush.bf16.msra.mxu0 %v2035
    %2359 = vmatpush.bf16.msra.mxu0 %v2034
    %2360 = vmatpush.bf16.msra.mxu0 %v2033
    %2361 = vmatpush.bf16.msra.mxu0 %v2032
    %2362 = vmatpush.bf16.msra.mxu0 %v2031
    %2363 = vmatpush.bf16.msra.mxu0 %v2030
    %2364 = vmatpush.bf16.msra.mxu0 %v2029
    %2365 = vmatmul.bf16.gmra.mxu0 %v1157
    %v2366 = vpop.f32.mrf.mxu0
    %v2367 = vadd.f32 %v2353, %v2366
    %v2368 = vpop.f32.mrf.mxu0
    %v2369 = vadd.f32 %v2355, %v2368
    %2370 = vdwg.mxu0
    %2371 = vmatpush.bf16.msra.mxu0 %v2044
    %2372 = vmatpush.bf16.msra.mxu0 %v2043
    %2373 = vmatpush.bf16.msra.mxu0 %v2042
    %2374 = vmatpush.bf16.msra.mxu0 %v2041
    %2375 = vmatpush.bf16.msra.mxu0 %v2040
    %2376 = vmatpush.bf16.msra.mxu0 %v2039
    %2377 = vmatpush.bf16.msra.mxu0 %v2038
    %2378 = vmatpush.bf16.msra.mxu0 %v2037
    %2379 = vmatmul.bf16.gmra.mxu0 %v1158
    %v2380 = vpop.f32.mrf.mxu0
    %v2381 = vadd.f32 %v2367, %v2380
    %v2382 = vpop.f32.mrf.mxu0
    %v2383 = vadd.f32 %v2369, %v2382
    %2384 = vdwg.mxu0
    %2385 = vmatpush.bf16.msra.mxu0 %v2052
    %2386 = vmatpush.bf16.msra.mxu0 %v2051
    %2387 = vmatpush.bf16.msra.mxu0 %v2050
    %2388 = vmatpush.bf16.msra.mxu0 %v2049
    %2389 = vmatpush.bf16.msra.mxu0 %v2048
    %2390 = vmatpush.bf16.msra.mxu0 %v2047
    %2391 = vmatpush.bf16.msra.mxu0 %v2046
    %2392 = vmatpush.bf16.msra.mxu0 %v2045
    %2393 = vmatmul.bf16.gmra.mxu0 %v1159
    %v2394 = vpop.f32.mrf.mxu0
    %v2395 = vadd.f32 %v2381, %v2394
    %v2396 = vpop.f32.mrf.mxu0
    %v2397 = vadd.f32 %v2383, %v2396
    %2398 = vdwg.mxu0
    %2399 = vmatpush.bf16.msra.mxu0 %v2060
    %2400 = vmatpush.bf16.msra.mxu0 %v2059
    %2401 = vmatpush.bf16.msra.mxu0 %v2058
    %2402 = vmatpush.bf16.msra.mxu0 %v2057
    %2403 = vmatpush.bf16.msra.mxu0 %v2056
    %2404 = vmatpush.bf16.msra.mxu0 %v2055
    %2405 = vmatpush.bf16.msra.mxu0 %v2054
    %2406 = vmatpush.bf16.msra.mxu0 %v2053
    %2407 = vmatmul.bf16.gmra.mxu0 %v1160
    %v2408 = vpop.f32.mrf.mxu0
    %v2409 = vadd.f32 %v2395, %v2408
    %v2410 = vpop.f32.mrf.mxu0
    %v2411 = vadd.f32 %v2397, %v2410
    %2412 = vdwg.mxu0
    %2413 = vst [vmem:[#allocation10] sm:$0xff] %v2409
    %2414 = vst [vmem:[#allocation10 + $0x8] sm:$0xff] %v2411
    // Predicated region
    $region38: #{tpu_custom_call.1} parent=1 // pred_check
      _
    $region39: #{tpu_custom_call.1} parent=1 // pred_check_branch
      %2416 = sbr.rel (0) target = $region41
    $region40: #{tpu_custom_call.1} parent=1 // pred_region
      %2418 = vsyncadd [#allocation4], 0
      %s2419 = sshll.u32 [#allocation10], 4
      %s2420 = int_to_ptr.vmem [resolvable:$true] %s2419
      %s2421 = sshll.u32 %s5, 4
      %s2422 = int_to_ptr.hbm [resolvable:$true] %s2421
      %2427 = dma.vmem_to_hbm [thread:$0]  %s2420, 256, %s2422, [#allocation4], 128, 128, 8
    $region41: #{tpu_custom_call.1} parent=1 // pred_fallthru
      _
    // Predicated region
    $region42: #{tpu_custom_call.1} parent=1 // pred_check
      _
    $region43: #{tpu_custom_call.1} parent=1 // pred_check_branch
      %2429 = sbr.rel (0) target = $region45
    $region44: #{tpu_custom_call.1} parent=1 // pred_region
      %2431 = dma.done [#allocation4], 256
    $region45: #{tpu_custom_call.1} parent=1 // pred_fallthru
      _
    %2432 = vsyncpa [#allocation3], 1
    %2433 = vsyncpa [#allocation6], 1
    %2434 = vsyncpa [#allocation9], 1
    %2435 = vsyncpa [#allocation4], 1

</llo_original>
